<compile_context>
chip_gen: v7x
topology: tpu7x:2x2x1
jax: 0.10.0
libtpu: 0.0.40
codegen_flags: <defaults>
</compile_context>

<pallas_src>
import math
import numpy as np
import jax
import jax.numpy as jnp
from jax import lax
from jax.experimental import pallas as pl
from jax.experimental.pallas import tpu as pltpu


def _round_up(n, m):
    return ((n + m - 1) // m) * m


# ----------------------------------------------------------------------------
# Pallas kernel: fused "pair_top" head with the input concat fused away.
#   h1 = relu(ant_sp@W1a + ant_em@W1b + ana_sp@W1c + ana_em@W1d + feat@W1e + b1)
#   h2 = relu(h1@W2 + b2); h3 = relu(h2@W3 + b3); score = h3@w4t^T   (b4 in wrapper)
# Output is produced lane-dense as a (1, TILE_M) row block.
# ----------------------------------------------------------------------------
def _pair_top_kernel(ant_sp_ref, ant_em_ref, ana_sp_ref, ana_em_ref, feat_ref,
                     w1a_ref, w1b_ref, w1c_ref, w1d_ref, w1e_ref, b1_ref,
                     w2_ref, b2_ref, w3_ref, b3_ref, w4t_ref,
                     out_ref):
    f32 = jnp.float32
    cdt = w2_ref.dtype  # MXU compute dtype (bf16)

    # Layer 1: split matmul over feature groups (avoids any in-kernel concat).
    h = jnp.dot(ant_em_ref[...], w1b_ref[...], preferred_element_type=f32)
    h = h + jnp.dot(ana_em_ref[...], w1d_ref[...], preferred_element_type=f32)
    h = h + jnp.dot(ant_sp_ref[...].astype(cdt), w1a_ref[...],
                    preferred_element_type=f32)
    h = h + jnp.dot(ana_sp_ref[...].astype(cdt), w1c_ref[...],
                    preferred_element_type=f32)
    h = h + jnp.dot(feat_ref[...].astype(cdt), w1e_ref[...],
                    preferred_element_type=f32)
    h = jnp.maximum(h + b1_ref[...], 0.0)

    h = jnp.maximum(
        jnp.dot(h.astype(cdt), w2_ref[...], preferred_element_type=f32)
        + b2_ref[...], 0.0)
    h = jnp.maximum(
        jnp.dot(h.astype(cdt), w3_ref[...], preferred_element_type=f32)
        + b3_ref[...], 0.0)

    # Final (folded) layer, emitted lane-dense: (1,H3) x (TILE_M,H3)^T -> (1,TILE_M).
    out_ref[...] = lax.dot_general(
        w4t_ref[...], h.astype(cdt),
        dimension_numbers=(((1,), (1,)), ((), ())),
        preferred_element_type=f32)


def pair_scores_pallas(parts, kp, *, tile_m_max=4096, min_grid=8):
    """Fused pair-scoring head.

    parts: (ant_spans, ant_embed, ana_spans, ana_embed, pair_features),
           each (N, d_i); embeddings bf16, spans/features f32.
    Returns (N,) f32 scores.

    NOTE: if tile_m_max is raised above ~4096 on v5e, also set
    pltpu.CompilerParams(vmem_limit_bytes=...) (v5e scoped default is 16 MiB).
    """
    ant_sp, ant_em, ana_sp, ana_em, feats = parts
    n = ant_sp.shape[0]
    d_sp, d_em, d_ft = ant_sp.shape[1], ant_em.shape[1], feats.shape[1]

    w1a, w1b, w1c, w1d, w1e = kp["w1_splits"]
    b1, w2, b2, w3, b3, w4t, b4 = (kp["b1"], kp["w2"], kp["b2"], kp["w3"],
                                   kp["b3"], kp["w4t"], kp["b4"])
    h1, h2, h3 = w2.shape[0], w3.shape[0], w4t.shape[1]

    # Row tile: as large as possible while keeping >= min_grid grid steps so
    # the "parallel" axis can still be sharded across TensorCores (v7x).
    tile_m = max(128, min(tile_m_max, _round_up(pl.cdiv(n, min_grid), 128)))
    grid_m = pl.cdiv(n, tile_m)
    n_pad = grid_m * tile_m   # output padded to whole blocks; sliced to [:n]

    def act_spec(d):
        return pl.BlockSpec((tile_m, d), lambda i: (i, 0))

    def res_spec(shape):
        return pl.BlockSpec(shape, lambda i: (0, 0))

    in_specs = [
        act_spec(d_sp), act_spec(d_em), act_spec(d_sp), act_spec(d_em),
        act_spec(d_ft),
        res_spec((d_sp, h1)), res_spec((d_em, h1)), res_spec((d_sp, h1)),
        res_spec((d_em, h1)), res_spec((d_ft, h1)), res_spec((1, h1)),
        res_spec((h1, h2)), res_spec((1, h2)),
        res_spec((h2, h3)), res_spec((1, h3)),
        res_spec((1, h3)),                               # w4t (folded, transposed)
    ]
    out_specs = pl.BlockSpec((1, tile_m), lambda i: (0, i))

    d_total = 2 * d_sp + 2 * d_em + d_ft
    weight_bytes = int((w1a.size + w1b.size + w1c.size + w1d.size + w1e.size
                        + w2.size + w3.size + w4t.size) * 2
                       + (b1.size + b2.size + b3.size) * 4)
    flops = int(2 * n * (d_total * h1 + h1 * h2 + h2 * h3 + h3))
    bytes_accessed = int(n * (2 * d_sp + d_ft) * 4     # f32 spans/features
                         + n * 2 * d_em * 2            # bf16 embeddings
                         + n * 4                       # f32 scores out
                         + weight_bytes)

    out = pl.pallas_call(
        _pair_top_kernel,
        out_shape=jax.ShapeDtypeStruct((1, n_pad), jnp.float32),
        grid_spec=pltpu.PrefetchScalarGridSpec(
            num_scalar_prefetch=0,
            grid=(grid_m,),
            in_specs=in_specs,
            out_specs=out_specs,
        ),
        compiler_params=pltpu.CompilerParams(
            dimension_semantics=("parallel",)),
        cost_estimate=pl.CostEstimate(flops=flops, transcendentals=0,
                                      bytes_accessed=bytes_accessed),
    )(ant_sp, ant_em, ana_sp, ana_em, feats,
      w1a, w1b, w1c, w1d, w1e, b1, w2, b2, w3, b3, w4t)

    # Folded (1,1) bias applied here (scalar) instead of a padded VMEM tile.
    return out[0, :n] + b4[0, 0]                         # (N,)


# ----------------------------------------------------------------------------
# Parameter construction (matches Model.init_weights: xavier_uniform weights,
# zero bias, uniform(-0.5, 0.5) embeddings) -- deterministic via PRNGKey.
# ----------------------------------------------------------------------------
def xavier_uniform(key, fan_in, fan_out):
    bound = math.sqrt(6.0 / (fan_in + fan_out))
    # Stored as (in, out) so the head does x @ W directly.
    return jax.random.uniform(key, (fan_in, fan_out), jnp.float32, -bound, bound)


def make_top_params(key, d_in, h1, h2, h3):
    """10 arrays: (w1,b1,...,w5,b5) with w: (in,out), b: (1,out)."""
    ks = jax.random.split(key, 5)
    dims = [(d_in, h1), (h1, h2), (h2, h3), (h3, 1), (1, 1)]
    params = []
    for k, (fi, fo) in zip(ks, dims):
        params.append(xavier_uniform(k, fi, fo))
        params.append(jnp.zeros((1, fo), jnp.float32))
    return tuple(params)


def fold_final_linear(params):
    """Fold Linear(1,1) into layer 4. Returns (w1,b1,w2,b2,w3,b3,w4t,b4).
    w4t has shape (1, H3) (pre-transposed for the lane-dense final dot)."""
    w1, b1, w2, b2, w3, b3, w4, b4, w5, b5 = params
    scale = w5[0, 0]
    w4f = (w4 * scale).T                    # (1, H3)
    b4f = b4 * scale + b5                   # (1, 1)
    return (w1, b1, w2, b2, w3, b3, w4f, b4f)


def make_pair_kernel_params(folded, col_splits, compute_dtype=jnp.bfloat16):
    """Cast matmul weights to the MXU dtype and split W1 by feature group so
    the kernel can consume un-concatenated inputs. Biases stay f32."""
    w1, b1, w2, b2, w3, b3, w4t, b4 = folded
    w1c = w1.astype(compute_dtype)
    splits, off = [], 0
    for c in col_splits:
        splits.append(w1c[off:off + c])
        off += c
    assert off == w1.shape[0]
    return dict(w1_splits=tuple(splits), b1=b1,
                w2=w2.astype(compute_dtype), b2=b2,
                w3=w3.astype(compute_dtype), b3=b3,
                w4t=w4t.astype(compute_dtype), b4=b4)


# Plain-JAX folded head (single-mention path, f32).
def mlp_head_jax(x, folded):
    w1, b1, w2, b2, w3, b3, w4t, b4 = folded
    h = jnp.maximum(x @ w1 + b1, 0.0)
    h = jnp.maximum(h @ w2 + b2, 0.0)
    h = jnp.maximum(h @ w3 + b3, 0.0)
    return h @ w4t.T + b4                   # (N, 1)


# Reference matching the kernel's mixed-precision / split-matmul semantics.
def pair_head_ref_matched(parts, kp):
    ant_sp, ant_em, ana_sp, ana_em, feats = parts
    w1a, w1b, w1c, w1d, w1e = kp["w1_splits"]
    cdt = w1a.dtype
    f32 = jnp.float32
    h = jnp.dot(ant_em.astype(cdt), w1b, preferred_element_type=f32)
    h = h + jnp.dot(ana_em.astype(cdt), w1d, preferred_element_type=f32)
    h = h + jnp.dot(ant_sp.astype(cdt), w1a, preferred_element_type=f32)
    h = h + jnp.dot(ana_sp.astype(cdt), w1c, preferred_element_type=f32)
    h = h + jnp.dot(feats.astype(cdt), w1e, preferred_element_type=f32)
    h = jnp.maximum(h + kp["b1"], 0.0)
    h = jnp.maximum(jnp.dot(h.astype(cdt), kp["w2"], preferred_element_type=f32)
                    + kp["b2"], 0.0)
    h = jnp.maximum(jnp.dot(h.astype(cdt), kp["w3"], preferred_element_type=f32)
                    + kp["b3"], 0.0)
    s = jnp.dot(h.astype(cdt), kp["w4t"].T, preferred_element_type=f32)
    return s[:, 0] + kp["b4"][0, 0]         # (N,)


def _pair_parts(ant_spans, ant_words, ana_spans, ana_words, pair_features,
                embed_table_bf16):
    """Flatten pair inputs to (N, d_i) groups; gather embeddings in bf16."""
    B, P = ana_spans.shape[0], ana_spans.shape[1]
    N = B * P
    ant_emb = jnp.take(embed_table_bf16, ant_words.reshape(-1).astype(jnp.int32),
                       axis=0).reshape(N, -1)
    ana_emb = jnp.take(embed_table_bf16, ana_words.reshape(-1).astype(jnp.int32),
                       axis=0).reshape(N, -1)
    return (ant_spans.reshape(N, -1), ant_emb,
            ana_spans.reshape(N, -1), ana_emb,
            pair_features.reshape(N, -1))


# ----------------------------------------------------------------------------
# Full forward pass (pairs variant, 8 inputs). Dropout = identity (eval).
# ----------------------------------------------------------------------------
def forward(inputs, embed_table_f32, embed_table_bf16, single_folded,
            pair_kparams, concat_axis=1):
    (spans, words, single_features,
     ant_spans, ant_words, ana_spans, ana_words, pair_features) = inputs

    B = spans.shape[0]
    P = ana_spans.shape[1]

    # Single-mention scores: B rows -> plain JAX f32 (kernel launch overhead
    # would dominate).
    embed_words = jnp.take(embed_table_f32, words.reshape(-1).astype(jnp.int32),
                           axis=0).reshape(B, -1)
    single_input = jnp.concatenate([spans, embed_words, single_features], axis=1)
    single_scores = mlp_head_jax(single_input, single_folded)         # (B, 1)

    # Pair scores: the hot path -> Pallas kernel. The 5 feature groups are fed
    # separately (no 296-wide pair_input materialized in HBM).
    # TODO(synk): fuse the embedding gather itself into the kernel (scalar-
    # prefetch word ids + per-row DMA from an HBM-resident table) to also
    # remove the ant/ana embedding HBM writeback.
    parts = _pair_parts(ant_spans, ant_words, ana_spans, ana_words,
                        pair_features, embed_table_bf16)
    pair_scores = pair_scores_pallas(parts, pair_kparams).reshape(B, P)

    return jnp.concatenate([pair_scores, single_scores], axis=concat_axis)


if __name__ == "__main__":
    # Small synthetic configuration.
    vocab_size = 50
    embedding_dim = 16
    H1, H2, H3 = 64, 32, 16
    D_span = 16            # span feature width
    W = 8                  # words per mention
    D_feat_single = 8
    D_feat_pair = 8
    B, P = 2, 4            # batch, pairs per example

    D_single_in = D_span + W * embedding_dim + D_feat_single          # 152
    D_pair_in = 2 * D_span + 2 * W * embedding_dim + D_feat_pair      # 296

    key = jax.random.PRNGKey(0)
    k_emb, k_single, k_pair, k_in = jax.random.split(key, 4)

    embed_table = jax.random.uniform(k_emb, (vocab_size, embedding_dim),
                                     jnp.float32, -0.5, 0.5)
    embed_table_bf16 = embed_table.astype(jnp.bfloat16)

    single_params = make_top_params(k_single, D_single_in, H1, H2, H3)
    pair_params = make_top_params(k_pair, D_pair_in, H1, H2, H3)

    single_folded = fold_final_linear(single_params)                   # f32, plain JAX
    pair_folded = fold_final_linear(pair_params)
    pair_col_splits = (D_span, W * embedding_dim, D_span,
                       W * embedding_dim, D_feat_pair)
    pair_kparams = make_pair_kernel_params(pair_folded, pair_col_splits,
                                           jnp.bfloat16)

    ks = jax.random.split(k_in, 8)
    spans = jax.random.normal(ks[0], (B, D_span), jnp.float32)
    words = jax.random.randint(ks[1], (B, W), 0, vocab_size)
    single_features = jax.random.normal(ks[2], (B, D_feat_single), jnp.float32)
    ant_spans = jax.random.normal(ks[3], (B, P, D_span), jnp.float32)
    ant_words = jax.random.randint(ks[4], (B, P, W), 0, vocab_size)
    ana_spans = jax.random.normal(ks[5], (B, P, D_span), jnp.float32)
    ana_words = jax.random.randint(ks[6], (B, P, W), 0, vocab_size)
    pair_features = jax.random.normal(ks[7], (B, P, D_feat_pair), jnp.float32)

    inputs = (spans, words, single_features,
              ant_spans, ant_words, ana_spans, ana_words, pair_features)

    total_scores = forward(inputs, embed_table, embed_table_bf16,
                           single_folded, pair_kparams)
    total_scores = jax.block_until_ready(total_scores)
    assert total_scores.shape == (B, P + 1)

    # Verify the Pallas pair head against a plain-JAX reference with matching
    # mixed-precision / split-matmul semantics.
    parts = _pair_parts(ant_spans, ant_words, ana_spans, ana_words,
                        pair_features, embed_table_bf16)
    got = jax.block_until_ready(pair_scores_pallas(parts, pair_kparams))
    ref = pair_head_ref_matched(parts, pair_kparams)
    np.testing.assert_allclose(np.asarray(got), np.asarray(ref),
                               rtol=1e-3, atol=1e-3)

    # The pair block of total_scores must match too.
    np.testing.assert_allclose(np.asarray(total_scores[:, :P]),
                               np.asarray(got).reshape(B, P),
                               rtol=1e-5, atol=1e-5)

    print("KERNEL_OK")
</pallas_src>

<mosaic_0001>
module attributes {stable_mosaic.version = 11 : i64} {
  func.func @_pair_top_kernel(%arg0: i32, %arg1: memref<128x16xf32, #tpu.memory_space<vmem>>, %arg2: memref<128x128xbf16, #tpu.memory_space<vmem>>, %arg3: memref<128x16xf32, #tpu.memory_space<vmem>>, %arg4: memref<128x128xbf16, #tpu.memory_space<vmem>>, %arg5: memref<128x8xf32, #tpu.memory_space<vmem>>, %arg6: memref<16x64xbf16, #tpu.memory_space<vmem>>, %arg7: memref<128x64xbf16, #tpu.memory_space<vmem>>, %arg8: memref<16x64xbf16, #tpu.memory_space<vmem>>, %arg9: memref<128x64xbf16, #tpu.memory_space<vmem>>, %arg10: memref<8x64xbf16, #tpu.memory_space<vmem>>, %arg11: memref<1x64xf32, #tpu.memory_space<vmem>>, %arg12: memref<64x32xbf16, #tpu.memory_space<vmem>>, %arg13: memref<1x32xf32, #tpu.memory_space<vmem>>, %arg14: memref<32x16xbf16, #tpu.memory_space<vmem>>, %arg15: memref<1x16xf32, #tpu.memory_space<vmem>>, %arg16: memref<1x16xbf16, #tpu.memory_space<vmem>>, %arg17: memref<1x128xf32, #tpu.memory_space<vmem>>) attributes {dimension_semantics = [#tpu.dimension_semantics<parallel>], iteration_bounds = array<i64: 1>, scalar_prefetch = 0 : i64, scratch_operands = 0 : i64, tpu.core_type = #tpu.core_type<tc>, window_params = [{transform_indices = @transform_0, window_bounds = array<i64: 128, 16>}, {transform_indices = @transform_1, window_bounds = array<i64: 128, 128>}, {transform_indices = @transform_2, window_bounds = array<i64: 128, 16>}, {transform_indices = @transform_3, window_bounds = array<i64: 128, 128>}, {transform_indices = @transform_4, window_bounds = array<i64: 128, 8>}, {pipeline_mode = #tpu.pipeline_mode<synchronous>, transform_indices = @transform_5, window_bounds = array<i64: 16, 64>}, {pipeline_mode = #tpu.pipeline_mode<synchronous>, transform_indices = @transform_6, window_bounds = array<i64: 128, 64>}, {pipeline_mode = #tpu.pipeline_mode<synchronous>, transform_indices = @transform_7, window_bounds = array<i64: 16, 64>}, {pipeline_mode = #tpu.pipeline_mode<synchronous>, transform_indices = @transform_8, window_bounds = array<i64: 128, 64>}, {pipeline_mode = #tpu.pipeline_mode<synchronous>, transform_indices = @transform_9, window_bounds = array<i64: 8, 64>}, {pipeline_mode = #tpu.pipeline_mode<synchronous>, transform_indices = @transform_10, window_bounds = array<i64: 1, 64>}, {pipeline_mode = #tpu.pipeline_mode<synchronous>, transform_indices = @transform_11, window_bounds = array<i64: 64, 32>}, {pipeline_mode = #tpu.pipeline_mode<synchronous>, transform_indices = @transform_12, window_bounds = array<i64: 1, 32>}, {pipeline_mode = #tpu.pipeline_mode<synchronous>, transform_indices = @transform_13, window_bounds = array<i64: 32, 16>}, {pipeline_mode = #tpu.pipeline_mode<synchronous>, transform_indices = @transform_14, window_bounds = array<i64: 1, 16>}, {pipeline_mode = #tpu.pipeline_mode<synchronous>, transform_indices = @transform_15, window_bounds = array<i64: 1, 16>}, {transform_indices = @transform_16, window_bounds = array<i64: 1, 128>}]} {
    %c0 = arith.constant 0 : index
    %c0_0 = arith.constant 0 : index
    %0 = vector.load %arg2[%c0, %c0_0] : memref<128x128xbf16, #tpu.memory_space<vmem>>, vector<128x128xbf16>
    %c0_1 = arith.constant 0 : index
    %c0_2 = arith.constant 0 : index
    %1 = vector.load %arg7[%c0_1, %c0_2] : memref<128x64xbf16, #tpu.memory_space<vmem>>, vector<128x64xbf16>
    %cst = arith.constant dense<0.000000e+00> : vector<128x64xf32>
    %2 = tpu.matmul %0, %1, %cst {dimension_numbers = #tpu.dot_dimension_numbers<[1], [0], [0], [1], [0, 0, 1, 1], [], []>} : vector<128x128xbf16>, vector<128x64xbf16>, vector<128x64xf32> -> vector<128x64xf32>
    %c0_3 = arith.constant 0 : index
    %c0_4 = arith.constant 0 : index
    %3 = vector.load %arg4[%c0_3, %c0_4] : memref<128x128xbf16, #tpu.memory_space<vmem>>, vector<128x128xbf16>
    %c0_5 = arith.constant 0 : index
    %c0_6 = arith.constant 0 : index
    %4 = vector.load %arg9[%c0_5, %c0_6] : memref<128x64xbf16, #tpu.memory_space<vmem>>, vector<128x64xbf16>
    %cst_7 = arith.constant dense<0.000000e+00> : vector<128x64xf32>
    %5 = tpu.matmul %3, %4, %cst_7 {dimension_numbers = #tpu.dot_dimension_numbers<[1], [0], [0], [1], [0, 0, 1, 1], [], []>} : vector<128x128xbf16>, vector<128x64xbf16>, vector<128x64xf32> -> vector<128x64xf32>
    %6 = arith.addf %2, %5 : vector<128x64xf32>
    %c0_8 = arith.constant 0 : index
    %c0_9 = arith.constant 0 : index
    %7 = vector.load %arg1[%c0_8, %c0_9] : memref<128x16xf32, #tpu.memory_space<vmem>>, vector<128x16xf32>
    %8 = arith.truncf %7 : vector<128x16xf32> to vector<128x16xbf16>
    %c0_10 = arith.constant 0 : index
    %c0_11 = arith.constant 0 : index
    %9 = vector.load %arg6[%c0_10, %c0_11] : memref<16x64xbf16, #tpu.memory_space<vmem>>, vector<16x64xbf16>
    %cst_12 = arith.constant dense<0.000000e+00> : vector<128x64xf32>
    %10 = tpu.matmul %8, %9, %cst_12 {dimension_numbers = #tpu.dot_dimension_numbers<[1], [0], [0], [1], [0, 0, 1, 1], [], []>} : vector<128x16xbf16>, vector<16x64xbf16>, vector<128x64xf32> -> vector<128x64xf32>
    %11 = arith.addf %6, %10 : vector<128x64xf32>
    %c0_13 = arith.constant 0 : index
    %c0_14 = arith.constant 0 : index
    %12 = vector.load %arg3[%c0_13, %c0_14] : memref<128x16xf32, #tpu.memory_space<vmem>>, vector<128x16xf32>
    %13 = arith.truncf %12 : vector<128x16xf32> to vector<128x16xbf16>
    %c0_15 = arith.constant 0 : index
    %c0_16 = arith.constant 0 : index
    %14 = vector.load %arg8[%c0_15, %c0_16] : memref<16x64xbf16, #tpu.memory_space<vmem>>, vector<16x64xbf16>
    %cst_17 = arith.constant dense<0.000000e+00> : vector<128x64xf32>
    %15 = tpu.matmul %13, %14, %cst_17 {dimension_numbers = #tpu.dot_dimension_numbers<[1], [0], [0], [1], [0, 0, 1, 1], [], []>} : vector<128x16xbf16>, vector<16x64xbf16>, vector<128x64xf32> -> vector<128x64xf32>
    %16 = arith.addf %11, %15 : vector<128x64xf32>
    %c0_18 = arith.constant 0 : index
    %c0_19 = arith.constant 0 : index
    %17 = vector.load %arg5[%c0_18, %c0_19] : memref<128x8xf32, #tpu.memory_space<vmem>>, vector<128x8xf32>
    %18 = arith.truncf %17 : vector<128x8xf32> to vector<128x8xbf16>
    %c0_20 = arith.constant 0 : index
    %c0_21 = arith.constant 0 : index
    %19 = vector.load %arg10[%c0_20, %c0_21] : memref<8x64xbf16, #tpu.memory_space<vmem>>, vector<8x64xbf16>
    %cst_22 = arith.constant dense<0.000000e+00> : vector<128x64xf32>
    %20 = tpu.matmul %18, %19, %cst_22 {dimension_numbers = #tpu.dot_dimension_numbers<[1], [0], [0], [1], [0, 0, 1, 1], [], []>} : vector<128x8xbf16>, vector<8x64xbf16>, vector<128x64xf32> -> vector<128x64xf32>
    %21 = arith.addf %16, %20 : vector<128x64xf32>
    %c0_23 = arith.constant 0 : index
    %c0_24 = arith.constant 0 : index
    %22 = vector.load %arg11[%c0_23, %c0_24] : memref<1x64xf32, #tpu.memory_space<vmem>>, vector<1x64xf32>
    %23 = vector.broadcast %22 : vector<1x64xf32> to vector<128x64xf32>
    %24 = arith.addf %21, %23 : vector<128x64xf32>
    %cst_25 = arith.constant 0.000000e+00 : f32
    %25 = vector.broadcast %cst_25 : f32 to vector<128x64xf32>
    %26 = arith.maximumf %24, %25 : vector<128x64xf32>
    %27 = arith.truncf %26 : vector<128x64xf32> to vector<128x64xbf16>
    %c0_26 = arith.constant 0 : index
    %c0_27 = arith.constant 0 : index
    %28 = vector.load %arg12[%c0_26, %c0_27] : memref<64x32xbf16, #tpu.memory_space<vmem>>, vector<64x32xbf16>
    %cst_28 = arith.constant dense<0.000000e+00> : vector<128x32xf32>
    %29 = tpu.matmul %27, %28, %cst_28 {dimension_numbers = #tpu.dot_dimension_numbers<[1], [0], [0], [1], [0, 0, 1, 1], [], []>} : vector<128x64xbf16>, vector<64x32xbf16>, vector<128x32xf32> -> vector<128x32xf32>
    %c0_29 = arith.constant 0 : index
    %c0_30 = arith.constant 0 : index
    %30 = vector.load %arg13[%c0_29, %c0_30] : memref<1x32xf32, #tpu.memory_space<vmem>>, vector<1x32xf32>
    %31 = vector.broadcast %30 : vector<1x32xf32> to vector<128x32xf32>
    %32 = arith.addf %29, %31 : vector<128x32xf32>
    %cst_31 = arith.constant 0.000000e+00 : f32
    %33 = vector.broadcast %cst_31 : f32 to vector<128x32xf32>
    %34 = arith.maximumf %32, %33 : vector<128x32xf32>
    %35 = arith.truncf %34 : vector<128x32xf32> to vector<128x32xbf16>
    %c0_32 = arith.constant 0 : index
    %c0_33 = arith.constant 0 : index
    %36 = vector.load %arg14[%c0_32, %c0_33] : memref<32x16xbf16, #tpu.memory_space<vmem>>, vector<32x16xbf16>
    %cst_34 = arith.constant dense<0.000000e+00> : vector<128x16xf32>
    %37 = tpu.matmul %35, %36, %cst_34 {dimension_numbers = #tpu.dot_dimension_numbers<[1], [0], [0], [1], [0, 0, 1, 1], [], []>} : vector<128x32xbf16>, vector<32x16xbf16>, vector<128x16xf32> -> vector<128x16xf32>
    %c0_35 = arith.constant 0 : index
    %c0_36 = arith.constant 0 : index
    %38 = vector.load %arg15[%c0_35, %c0_36] : memref<1x16xf32, #tpu.memory_space<vmem>>, vector<1x16xf32>
    %39 = vector.broadcast %38 : vector<1x16xf32> to vector<128x16xf32>
    %40 = arith.addf %37, %39 : vector<128x16xf32>
    %cst_37 = arith.constant 0.000000e+00 : f32
    %41 = vector.broadcast %cst_37 : f32 to vector<128x16xf32>
    %42 = arith.maximumf %40, %41 : vector<128x16xf32>
    %c0_38 = arith.constant 0 : index
    %c0_39 = arith.constant 0 : index
    %43 = vector.load %arg16[%c0_38, %c0_39] : memref<1x16xbf16, #tpu.memory_space<vmem>>, vector<1x16xbf16>
    %44 = arith.truncf %42 : vector<128x16xf32> to vector<128x16xbf16>
    %cst_40 = arith.constant dense<0.000000e+00> : vector<1x128xf32>
    %45 = tpu.matmul %43, %44, %cst_40 {dimension_numbers = #tpu.dot_dimension_numbers<[1], [1], [0], [0], [0, 0, 1, 0], [], []>} : vector<1x16xbf16>, vector<128x16xbf16>, vector<1x128xf32> -> vector<1x128xf32>
    %c0_41 = arith.constant 0 : index
    %c0_42 = arith.constant 0 : index
    %46 = vector.load %arg17[%c0_41, %c0_42] : memref<1x128xf32, #tpu.memory_space<vmem>>, vector<1x128xf32>
    tpu.vector_store %arg17[%c0_41, %c0_42], %45 {strides = array<i32>} : memref<1x128xf32, #tpu.memory_space<vmem>>, vector<1x128xf32>,
    return
  }
  func.func @transform_0(%arg0: i32) -> (i32, i32) {
    %c0_i32 = arith.constant 0 : i32
    %c0_i32_0 = arith.constant 0 : i32
    return %arg0, %c0_i32 : i32, i32
  }
  func.func @transform_1(%arg0: i32) -> (i32, i32) {
    %c0_i32 = arith.constant 0 : i32
    %c0_i32_0 = arith.constant 0 : i32
    return %arg0, %c0_i32 : i32, i32
  }
  func.func @transform_2(%arg0: i32) -> (i32, i32) {
    %c0_i32 = arith.constant 0 : i32
    %c0_i32_0 = arith.constant 0 : i32
    return %arg0, %c0_i32 : i32, i32
  }
  func.func @transform_3(%arg0: i32) -> (i32, i32) {
    %c0_i32 = arith.constant 0 : i32
    %c0_i32_0 = arith.constant 0 : i32
    return %arg0, %c0_i32 : i32, i32
  }
  func.func @transform_4(%arg0: i32) -> (i32, i32) {
    %c0_i32 = arith.constant 0 : i32
    %c0_i32_0 = arith.constant 0 : i32
    return %arg0, %c0_i32 : i32, i32
  }
  func.func @transform_5(%arg0: i32) -> (i32, i32) {
    %c0_i32 = arith.constant 0 : i32
    %c0_i32_0 = arith.constant 0 : i32
    %c0_i32_1 = arith.constant 0 : i32
    return %c0_i32, %c0_i32_0 : i32, i32
  }
  func.func @transform_6(%arg0: i32) -> (i32, i32) {
    %c0_i32 = arith.constant 0 : i32
    %c0_i32_0 = arith.constant 0 : i32
    %c0_i32_1 = arith.constant 0 : i32
    return %c0_i32, %c0_i32_0 : i32, i32
  }
  func.func @transform_7(%arg0: i32) -> (i32, i32) {
    %c0_i32 = arith.constant 0 : i32
    %c0_i32_0 = arith.constant 0 : i32
    %c0_i32_1 = arith.constant 0 : i32
    return %c0_i32, %c0_i32_0 : i32, i32
  }
  func.func @transform_8(%arg0: i32) -> (i32, i32) {
    %c0_i32 = arith.constant 0 : i32
    %c0_i32_0 = arith.constant 0 : i32
    %c0_i32_1 = arith.constant 0 : i32
    return %c0_i32, %c0_i32_0 : i32, i32
  }
  func.func @transform_9(%arg0: i32) -> (i32, i32) {
    %c0_i32 = arith.constant 0 : i32
    %c0_i32_0 = arith.constant 0 : i32
    %c0_i32_1 = arith.constant 0 : i32
    return %c0_i32, %c0_i32_0 : i32, i32
  }
  func.func @transform_10(%arg0: i32) -> (i32, i32) {
    %c0_i32 = arith.constant 0 : i32
    %c0_i32_0 = arith.constant 0 : i32
    %c0_i32_1 = arith.constant 0 : i32
    return %c0_i32, %c0_i32_0 : i32, i32
  }
  func.func @transform_11(%arg0: i32) -> (i32, i32) {
    %c0_i32 = arith.constant 0 : i32
    %c0_i32_0 = arith.constant 0 : i32
    %c0_i32_1 = arith.constant 0 : i32
    return %c0_i32, %c0_i32_0 : i32, i32
  }
  func.func @transform_12(%arg0: i32) -> (i32, i32) {
    %c0_i32 = arith.constant 0 : i32
    %c0_i32_0 = arith.constant 0 : i32
    %c0_i32_1 = arith.constant 0 : i32
    return %c0_i32, %c0_i32_0 : i32, i32
  }
  func.func @transform_13(%arg0: i32) -> (i32, i32) {
    %c0_i32 = arith.constant 0 : i32
    %c0_i32_0 = arith.constant 0 : i32
    %c0_i32_1 = arith.constant 0 : i32
    return %c0_i32, %c0_i32_0 : i32, i32
  }
  func.func @transform_14(%arg0: i32) -> (i32, i32) {
    %c0_i32 = arith.constant 0 : i32
    %c0_i32_0 = arith.constant 0 : i32
    %c0_i32_1 = arith.constant 0 : i32
    return %c0_i32, %c0_i32_0 : i32, i32
  }
  func.func @transform_15(%arg0: i32) -> (i32, i32) {
    %c0_i32 = arith.constant 0 : i32
    %c0_i32_0 = arith.constant 0 : i32
    %c0_i32_1 = arith.constant 0 : i32
    return %c0_i32, %c0_i32_0 : i32, i32
  }
  func.func @transform_16(%arg0: i32) -> (i32, i32) {
    %c0_i32 = arith.constant 0 : i32
    %c0_i32_0 = arith.constant 0 : i32
    return %c0_i32, %arg0 : i32, i32
  }
}

</mosaic_0001>

<llo_original>
// kernel: tpu_custom_call.1
$region0: #{tpu_custom_call.1}
  #allocation0 [shape = 'u32[]', space=smem, size = 0x4, offset = 0x4, fixed_abs, tag = 'smem constant byte address 0x4 - core index']
  #allocation1 [shape = 'u32[144,128]{1,0:T(1,128)}', space=vmem, size = 0x12000, scoped, tag = 'internal scratch']
  %s0 = inlined_call_operand.vmem [shape: f32[8,16], index: 0, kind: input, shape index: {}]
  %s1 = inlined_call_operand.vmem [shape: bf16[8,128], index: 1, kind: input, shape index: {}]
  %s2 = inlined_call_operand.vmem [shape: f32[8,16], index: 2, kind: input, shape index: {}]
  %s3 = inlined_call_operand.vmem [shape: bf16[8,128], index: 3, kind: input, shape index: {}]
  %s4 = inlined_call_operand.vmem [shape: f32[8,8], index: 4, kind: input, shape index: {}]
  %s5 = inlined_call_operand.vmem [shape: bf16[16,64], index: 5, kind: input, shape index: {}]
  %s6 = inlined_call_operand.vmem [shape: bf16[128,64], index: 6, kind: input, shape index: {}]
  %s7 = inlined_call_operand.vmem [shape: bf16[16,64], index: 7, kind: input, shape index: {}]
  %s8 = inlined_call_operand.vmem [shape: bf16[128,64], index: 8, kind: input, shape index: {}]
  %s9 = inlined_call_operand.vmem [shape: bf16[8,64], index: 9, kind: input, shape index: {}]
  %s10 = inlined_call_operand.vmem [shape: f32[1,64], index: 10, kind: input, shape index: {}]
  %s11 = inlined_call_operand.vmem [shape: bf16[64,32], index: 11, kind: input, shape index: {}]
  %s12 = inlined_call_operand.vmem [shape: f32[1,32], index: 12, kind: input, shape index: {}]
  %s13 = inlined_call_operand.vmem [shape: bf16[32,16], index: 13, kind: input, shape index: {}]
  %s14 = inlined_call_operand.vmem [shape: f32[1,16], index: 14, kind: input, shape index: {}]
  %s15 = inlined_call_operand.vmem [shape: bf16[1,16], index: 15, kind: input, shape index: {}]
  %s16 = inlined_call_operand.hbm [shape: f32[1,128], index: 16, kind: output, shape index: {}]
  %s17 = sld [smem:[#allocation0]]
  $region74: #{tpu_custom_call.1} parent=0
    _
  %s19 = ssub.s32 1, %s17
  %s20 = scalar_select 0, %s19, %s17
  $region1: #{tpu_custom_call.1} parent=0
    #allocation2 [shape = 'u8[512]{0}', space=vmem, size = 0x400, scoped, tag = 'output window, operand 0, single buffered']
    #allocation3 [shape = 's32[1]{0}', space=sflag, size = 0x4, scoped, tag = 'scoped memory for tpu_custom_call.1']
    %21 = vsyncpa [#allocation3], 0
    // Predicated region
    $region2: #{tpu_custom_call.1} parent=1 // pred_check
      _
    $region3: #{tpu_custom_call.1} parent=1 // pred_check_branch
      %23 = sbr.rel (0) target = $region5
    $region4: #{tpu_custom_call.1} parent=1 // pred_region
      _
    $region5: #{tpu_custom_call.1} parent=1 // pred_fallthru
      _
    // Predicated region
    $region6: #{tpu_custom_call.1} parent=1 // pred_check
      _
    $region7: #{tpu_custom_call.1} parent=1 // pred_check_branch
      %25 = sbr.rel (0) target = $region9
    $region8: #{tpu_custom_call.1} parent=1 // pred_region
      _
    $region9: #{tpu_custom_call.1} parent=1 // pred_fallthru
      _
    // Predicated region
    $region10: #{tpu_custom_call.1} parent=1 // pred_check
      _
    $region11: #{tpu_custom_call.1} parent=1 // pred_check_branch
      %27 = sbr.rel (0) target = $region13
    $region12: #{tpu_custom_call.1} parent=1 // pred_region
      _
    $region13: #{tpu_custom_call.1} parent=1 // pred_fallthru
      _
    // Predicated region
    $region14: #{tpu_custom_call.1} parent=1 // pred_check
      _
    $region15: #{tpu_custom_call.1} parent=1 // pred_check_branch
      %29 = sbr.rel (0) target = $region17
    $region16: #{tpu_custom_call.1} parent=1 // pred_region
      _
    $region17: #{tpu_custom_call.1} parent=1 // pred_fallthru
      _
    // Predicated region
    $region18: #{tpu_custom_call.1} parent=1 // pred_check
      _
    $region19: #{tpu_custom_call.1} parent=1 // pred_check_branch
      %31 = sbr.rel (0) target = $region21
    $region20: #{tpu_custom_call.1} parent=1 // pred_region
      _
    $region21: #{tpu_custom_call.1} parent=1 // pred_fallthru
      _
    // Predicated region
    $region22: #{tpu_custom_call.1} parent=1 // pred_check
      _
    $region23: #{tpu_custom_call.1} parent=1 // pred_check_branch
      %33 = sbr.rel (0) target = $region25
    $region24: #{tpu_custom_call.1} parent=1 // pred_region
      _
    $region25: #{tpu_custom_call.1} parent=1 // pred_fallthru
      _
    // Predicated region
    $region26: #{tpu_custom_call.1} parent=1 // pred_check
      _
    $region27: #{tpu_custom_call.1} parent=1 // pred_check_branch
      %35 = sbr.rel (0) target = $region29
    $region28: #{tpu_custom_call.1} parent=1 // pred_region
      _
    $region29: #{tpu_custom_call.1} parent=1 // pred_fallthru
      _
    // Predicated region
    $region30: #{tpu_custom_call.1} parent=1 // pred_check
      _
    $region31: #{tpu_custom_call.1} parent=1 // pred_check_branch
      %37 = sbr.rel (0) target = $region33
    $region32: #{tpu_custom_call.1} parent=1 // pred_region
      _
    $region33: #{tpu_custom_call.1} parent=1 // pred_fallthru
      _
    // Predicated region
    $region34: #{tpu_custom_call.1} parent=1 // pred_check
      _
    $region35: #{tpu_custom_call.1} parent=1 // pred_check_branch
      %39 = sbr.rel (0) target = $region37
    $region36: #{tpu_custom_call.1} parent=1 // pred_region
      _
    $region37: #{tpu_custom_call.1} parent=1 // pred_fallthru
      _
    // Predicated region
    $region38: #{tpu_custom_call.1} parent=1 // pred_check
      _
    $region39: #{tpu_custom_call.1} parent=1 // pred_check_branch
      %41 = sbr.rel (0) target = $region41
    $region40: #{tpu_custom_call.1} parent=1 // pred_region
      _
    $region41: #{tpu_custom_call.1} parent=1 // pred_fallthru
      _
    // Predicated region
    $region42: #{tpu_custom_call.1} parent=1 // pred_check
      _
    $region43: #{tpu_custom_call.1} parent=1 // pred_check_branch
      %43 = sbr.rel (0) target = $region45
    $region44: #{tpu_custom_call.1} parent=1 // pred_region
      _
    $region45: #{tpu_custom_call.1} parent=1 // pred_fallthru
      _
    // Predicated region
    $region46: #{tpu_custom_call.1} parent=1 // pred_check
      _
    $region47: #{tpu_custom_call.1} parent=1 // pred_check_branch
      %45 = sbr.rel (0) target = $region49
    $region48: #{tpu_custom_call.1} parent=1 // pred_region
      _
    $region49: #{tpu_custom_call.1} parent=1 // pred_fallthru
      _
    // Predicated region
    $region50: #{tpu_custom_call.1} parent=1 // pred_check
      _
    $region51: #{tpu_custom_call.1} parent=1 // pred_check_branch
      %47 = sbr.rel (0) target = $region53
    $region52: #{tpu_custom_call.1} parent=1 // pred_region
      _
    $region53: #{tpu_custom_call.1} parent=1 // pred_fallthru
      _
    // Predicated region
    $region54: #{tpu_custom_call.1} parent=1 // pred_check
      _
    $region55: #{tpu_custom_call.1} parent=1 // pred_check_branch
      %49 = sbr.rel (0) target = $region57
    $region56: #{tpu_custom_call.1} parent=1 // pred_region
      _
    $region57: #{tpu_custom_call.1} parent=1 // pred_fallthru
      _
    // Predicated region
    $region58: #{tpu_custom_call.1} parent=1 // pred_check
      _
    $region59: #{tpu_custom_call.1} parent=1 // pred_check_branch
      %51 = sbr.rel (0) target = $region61
    $region60: #{tpu_custom_call.1} parent=1 // pred_region
      _
    $region61: #{tpu_custom_call.1} parent=1 // pred_fallthru
      _
    // Predicated region
    $region62: #{tpu_custom_call.1} parent=1 // pred_check
      _
    $region63: #{tpu_custom_call.1} parent=1 // pred_check_branch
      %53 = sbr.rel (0) target = $region65
    $region64: #{tpu_custom_call.1} parent=1 // pred_region
      _
    $region65: #{tpu_custom_call.1} parent=1 // pred_fallthru
      _
    %v55 = vld [vmem:[%s1] sm:$0xf]
    %v56 = vld [vmem:[%s1 + $0x4] sm:$0xf]
    %v57 = vld [vmem:[%s1 + $0x8] sm:$0xf]
    %v58 = vld [vmem:[%s1 + $0xc] sm:$0xf]
    %v59 = vld [vmem:[%s1 + $0x10] sm:$0xf]
    %v60 = vld [vmem:[%s1 + $0x14] sm:$0xf]
    %v61 = vld [vmem:[%s1 + $0x18] sm:$0xf]
    %v62 = vld [vmem:[%s1 + $0x1c] sm:$0xf]
    %v63 = vld [vmem:[%s1 + $0x20] sm:$0xf]
    %v64 = vld [vmem:[%s1 + $0x24] sm:$0xf]
    %v65 = vld [vmem:[%s1 + $0x28] sm:$0xf]
    %v66 = vld [vmem:[%s1 + $0x2c] sm:$0xf]
    %v67 = vld [vmem:[%s1 + $0x30] sm:$0xf]
    %v68 = vld [vmem:[%s1 + $0x34] sm:$0xf]
    %v69 = vld [vmem:[%s1 + $0x38] sm:$0xf]
    %v70 = vld [vmem:[%s1 + $0x3c] sm:$0xf]
    %v71 = vld [vmem:[%s6] sm:$0xf]
    %v72 = vld [vmem:[%s6 + $0x4] sm:$0xf]
    %v73 = vld [vmem:[%s6 + $0x8] sm:$0xf]
    %v74 = vld [vmem:[%s6 + $0xc] sm:$0xf]
    %v75 = vld [vmem:[%s6 + $0x10] sm:$0xf]
    %v76 = vld [vmem:[%s6 + $0x14] sm:$0xf]
    %v77 = vld [vmem:[%s6 + $0x18] sm:$0xf]
    %v78 = vld [vmem:[%s6 + $0x1c] sm:$0xf]
    %v79 = vld [vmem:[%s6 + $0x20] sm:$0xf]
    %v80 = vld [vmem:[%s6 + $0x24] sm:$0xf]
    %v81 = vld [vmem:[%s6 + $0x28] sm:$0xf]
    %v82 = vld [vmem:[%s6 + $0x2c] sm:$0xf]
    %v83 = vld [vmem:[%s6 + $0x30] sm:$0xf]
    %v84 = vld [vmem:[%s6 + $0x34] sm:$0xf]
    %v85 = vld [vmem:[%s6 + $0x38] sm:$0xf]
    %v86 = vld [vmem:[%s6 + $0x3c] sm:$0xf]
    %v87 = vld [vmem:[%s3] sm:$0xf]
    %v88 = vld [vmem:[%s3 + $0x4] sm:$0xf]
    %v89 = vld [vmem:[%s3 + $0x8] sm:$0xf]
    %v90 = vld [vmem:[%s3 + $0xc] sm:$0xf]
    %v91 = vld [vmem:[%s3 + $0x10] sm:$0xf]
    %v92 = vld [vmem:[%s3 + $0x14] sm:$0xf]
    %v93 = vld [vmem:[%s3 + $0x18] sm:$0xf]
    %v94 = vld [vmem:[%s3 + $0x1c] sm:$0xf]
    %v95 = vld [vmem:[%s3 + $0x20] sm:$0xf]
    %v96 = vld [vmem:[%s3 + $0x24] sm:$0xf]
    %v97 = vld [vmem:[%s3 + $0x28] sm:$0xf]
    %v98 = vld [vmem:[%s3 + $0x2c] sm:$0xf]
    %v99 = vld [vmem:[%s3 + $0x30] sm:$0xf]
    %v100 = vld [vmem:[%s3 + $0x34] sm:$0xf]
    %v101 = vld [vmem:[%s3 + $0x38] sm:$0xf]
    %v102 = vld [vmem:[%s3 + $0x3c] sm:$0xf]
    %v103 = vld [vmem:[%s8] sm:$0xf]
    %v104 = vld [vmem:[%s8 + $0x4] sm:$0xf]
    %v105 = vld [vmem:[%s8 + $0x8] sm:$0xf]
    %v106 = vld [vmem:[%s8 + $0xc] sm:$0xf]
    %v107 = vld [vmem:[%s8 + $0x10] sm:$0xf]
    %v108 = vld [vmem:[%s8 + $0x14] sm:$0xf]
    %v109 = vld [vmem:[%s8 + $0x18] sm:$0xf]
    %v110 = vld [vmem:[%s8 + $0x1c] sm:$0xf]
    %v111 = vld [vmem:[%s8 + $0x20] sm:$0xf]
    %v112 = vld [vmem:[%s8 + $0x24] sm:$0xf]
    %v113 = vld [vmem:[%s8 + $0x28] sm:$0xf]
    %v114 = vld [vmem:[%s8 + $0x2c] sm:$0xf]
    %v115 = vld [vmem:[%s8 + $0x30] sm:$0xf]
    %v116 = vld [vmem:[%s8 + $0x34] sm:$0xf]
    %v117 = vld [vmem:[%s8 + $0x38] sm:$0xf]
    %v118 = vld [vmem:[%s8 + $0x3c] sm:$0xf]
    %v135 = vunpack.c.l.b16 %v87
    %v136 = vunpack.c.l.b16 %v88
    %v137 = vunpack.c.l.b16 %v89
    %v138 = vunpack.c.l.b16 %v90
    %v139 = vunpack.c.l.b16 %v91
    %v140 = vunpack.c.l.b16 %v92
    %v141 = vunpack.c.l.b16 %v93
    %v142 = vunpack.c.l.b16 %v94
    %v143 = vunpack.c.l.b16 %v95
    %v144 = vunpack.c.l.b16 %v96
    %v145 = vunpack.c.l.b16 %v97
    %v146 = vunpack.c.l.b16 %v98
    %v147 = vunpack.c.l.b16 %v99
    %v148 = vunpack.c.l.b16 %v100
    %v149 = vunpack.c.l.b16 %v101
    %v150 = vunpack.c.l.b16 %v102
    %v151 = vpack.c.b16 %v136, %v135
    %v152 = vpack.c.b16 %v138, %v137
    %v153 = vpack.c.b16 %v140, %v139
    %v154 = vpack.c.b16 %v142, %v141
    %v155 = vpack.c.b16 %v144, %v143
    %v156 = vpack.c.b16 %v146, %v145
    %v157 = vpack.c.b16 %v148, %v147
    %v158 = vpack.c.b16 %v150, %v149
    %v183 = vunpack.c.l.b16 %v103
    %v184 = vunpack.c.l.b16 %v104
    %v185 = vunpack.c.l.b16 %v105
    %v186 = vunpack.c.l.b16 %v106
    %v187 = vunpack.c.l.b16 %v107
    %v188 = vunpack.c.l.b16 %v108
    %v189 = vunpack.c.l.b16 %v109
    %v190 = vunpack.c.l.b16 %v110
    %v191 = vunpack.c.l.b16 %v111
    %v192 = vunpack.c.l.b16 %v112
    %v193 = vunpack.c.l.b16 %v113
    %v194 = vunpack.c.l.b16 %v114
    %v195 = vunpack.c.l.b16 %v115
    %v196 = vunpack.c.l.b16 %v116
    %v197 = vunpack.c.l.b16 %v117
    %v198 = vunpack.c.l.b16 %v118
    %v199 = vpack.c.b16 %v184, %v183
    %v200 = vpack.c.b16 %v186, %v185
    %v201 = vpack.c.b16 %v188, %v187
    %v202 = vpack.c.b16 %v190, %v189
    %v203 = vpack.c.b16 %v192, %v191
    %v204 = vpack.c.b16 %v194, %v193
    %v205 = vpack.c.b16 %v196, %v195
    %v206 = vpack.c.b16 %v198, %v197
    %215 = vmatprep.subr.bf16.mxu0 0
    %216 = vmatpush1.bf16.msra.mxu0 %v199
    %217 = vmatprep.subr.bf16.mxu0 0
    %218 = vmatpush1.bf16.msra.mxu0 %v200
    %219 = vmatprep.subr.bf16.mxu0 0
    %220 = vmatpush1.bf16.msra.mxu0 %v201
    %221 = vmatprep.subr.bf16.mxu0 0
    %222 = vmatpush1.bf16.msra.mxu0 %v202
    %223 = vmatprep.subr.bf16.mxu0 0
    %224 = vmatpush1.bf16.msra.mxu0 %v203
    %225 = vmatprep.subr.bf16.mxu0 0
    %226 = vmatpush1.bf16.msra.mxu0 %v204
    %227 = vmatprep.subr.bf16.mxu0 0
    %228 = vmatpush1.bf16.msra.mxu0 %v205
    %229 = vmatprep.subr.bf16.mxu0 0
    %230 = vmatpush1.bf16.msra.mxu0 %v206
    %231 = vmatprep.subr.bf16.mxu0 0
    %232 = vmatpush1.bf16.msra.mxu0 0
    %233 = vmatprep.subr.bf16.mxu0 0
    %234 = vmatpush1.bf16.msra.mxu0 0
    %235 = vmatprep.subr.bf16.mxu0 0
    %236 = vmatpush1.bf16.msra.mxu0 0
    %237 = vmatprep.subr.bf16.mxu0 0
    %238 = vmatpush1.bf16.msra.mxu0 0
    %239 = vmatprep.subr.bf16.mxu0 0
    %240 = vmatpush1.bf16.msra.mxu0 0
    %241 = vmatprep.subr.bf16.mxu0 0
    %242 = vmatpush1.bf16.msra.mxu0 0
    %243 = vmatprep.subr.bf16.mxu0 0
    %244 = vmatpush1.bf16.msra.mxu0 0
    %245 = vmatprep.subr.bf16.mxu0 0
    %246 = vmatpush1.bf16.msra.mxu0 0
    %247 = vmatprep.mubr.bf16.mxu0 0
    %248 = vmatmul.mubr.bf16.gmra.mrb[0].mxu0 %v151
    %v249 = vpop.f32.mrb[0].mxu0
    %v250 = vadd.f32 0.0, %v249
    %v251 = vpop.f32.mrb[0].mxu0
    %v252 = vpop.f32.mrb[0].mxu0
    %v253 = vadd.f32 0.0, %v252
    %v254 = vpop.f32.mrb[0].mxu0
    %255 = vmatprep.mubr.bf16.mxu0 0
    %256 = vmatmul.mubr.bf16.gmra.mrb[0].mxu0 %v152
    %v257 = vpop.f32.mrb[0].mxu0
    %v258 = vadd.f32 0.0, %v257
    %v259 = vpop.f32.mrb[0].mxu0
    %v260 = vpop.f32.mrb[0].mxu0
    %v261 = vadd.f32 0.0, %v260
    %v262 = vpop.f32.mrb[0].mxu0
    %263 = vmatprep.mubr.bf16.mxu0 0
    %264 = vmatmul.mubr.bf16.gmra.mrb[0].mxu0 %v153
    %v265 = vpop.f32.mrb[0].mxu0
    %v266 = vadd.f32 0.0, %v265
    %v267 = vpop.f32.mrb[0].mxu0
    %v268 = vpop.f32.mrb[0].mxu0
    %v269 = vadd.f32 0.0, %v268
    %v270 = vpop.f32.mrb[0].mxu0
    %271 = vmatprep.mubr.bf16.mxu0 0
    %272 = vmatmul.mubr.bf16.gmra.mrb[0].mxu0 %v154
    %v273 = vpop.f32.mrb[0].mxu0
    %v274 = vadd.f32 0.0, %v273
    %v275 = vpop.f32.mrb[0].mxu0
    %v276 = vpop.f32.mrb[0].mxu0
    %v277 = vadd.f32 0.0, %v276
    %v278 = vpop.f32.mrb[0].mxu0
    %279 = vmatprep.mubr.bf16.mxu0 0
    %280 = vmatmul.mubr.bf16.gmra.mrb[0].mxu0 %v155
    %v281 = vpop.f32.mrb[0].mxu0
    %v282 = vadd.f32 0.0, %v281
    %v283 = vpop.f32.mrb[0].mxu0
    %v284 = vpop.f32.mrb[0].mxu0
    %v285 = vadd.f32 0.0, %v284
    %v286 = vpop.f32.mrb[0].mxu0
    %287 = vmatprep.mubr.bf16.mxu0 0
    %288 = vmatmul.mubr.bf16.gmra.mrb[0].mxu0 %v156
    %v289 = vpop.f32.mrb[0].mxu0
    %v290 = vadd.f32 0.0, %v289
    %v291 = vpop.f32.mrb[0].mxu0
    %v292 = vpop.f32.mrb[0].mxu0
    %v293 = vadd.f32 0.0, %v292
    %v294 = vpop.f32.mrb[0].mxu0
    %295 = vmatprep.mubr.bf16.mxu0 0
    %296 = vmatmul.mubr.bf16.gmra.mrb[0].mxu0 %v157
    %v297 = vpop.f32.mrb[0].mxu0
    %v298 = vadd.f32 0.0, %v297
    %v299 = vpop.f32.mrb[0].mxu0
    %v300 = vpop.f32.mrb[0].mxu0
    %v301 = vadd.f32 0.0, %v300
    %v302 = vpop.f32.mrb[0].mxu0
    %303 = vmatprep.mubr.bf16.mxu0 0
    %304 = vmatmul.mubr.bf16.gmra.mrb[0].mxu0 %v158
    %v305 = vpop.f32.mrb[0].mxu0
    %v306 = vadd.f32 0.0, %v305
    %v307 = vpop.f32.mrb[0].mxu0
    %v308 = vpop.f32.mrb[0].mxu0
    %v309 = vadd.f32 0.0, %v308
    %v310 = vpop.f32.mrb[0].mxu0
    %311 = vdwg.mxu0
    %v328 = vunpack.c.l.b16 %v55
    %v329 = vunpack.c.l.b16 %v56
    %v330 = vunpack.c.l.b16 %v57
    %v331 = vunpack.c.l.b16 %v58
    %v332 = vunpack.c.l.b16 %v59
    %v333 = vunpack.c.l.b16 %v60
    %v334 = vunpack.c.l.b16 %v61
    %v335 = vunpack.c.l.b16 %v62
    %v336 = vunpack.c.l.b16 %v63
    %v337 = vunpack.c.l.b16 %v64
    %v338 = vunpack.c.l.b16 %v65
    %v339 = vunpack.c.l.b16 %v66
    %v340 = vunpack.c.l.b16 %v67
    %v341 = vunpack.c.l.b16 %v68
    %v342 = vunpack.c.l.b16 %v69
    %v343 = vunpack.c.l.b16 %v70
    %v344 = vpack.c.b16 %v329, %v328
    %v345 = vpack.c.b16 %v331, %v330
    %v346 = vpack.c.b16 %v333, %v332
    %v347 = vpack.c.b16 %v335, %v334
    %v348 = vpack.c.b16 %v337, %v336
    %v349 = vpack.c.b16 %v339, %v338
    %v350 = vpack.c.b16 %v341, %v340
    %v351 = vpack.c.b16 %v343, %v342
    %v376 = vunpack.c.l.b16 %v71
    %v377 = vunpack.c.l.b16 %v72
    %v378 = vunpack.c.l.b16 %v73
    %v379 = vunpack.c.l.b16 %v74
    %v380 = vunpack.c.l.b16 %v75
    %v381 = vunpack.c.l.b16 %v76
    %v382 = vunpack.c.l.b16 %v77
    %v383 = vunpack.c.l.b16 %v78
    %v384 = vunpack.c.l.b16 %v79
    %v385 = vunpack.c.l.b16 %v80
    %v386 = vunpack.c.l.b16 %v81
    %v387 = vunpack.c.l.b16 %v82
    %v388 = vunpack.c.l.b16 %v83
    %v389 = vunpack.c.l.b16 %v84
    %v390 = vunpack.c.l.b16 %v85
    %v391 = vunpack.c.l.b16 %v86
    %v392 = vpack.c.b16 %v377, %v376
    %v393 = vpack.c.b16 %v379, %v378
    %v394 = vpack.c.b16 %v381, %v380
    %v395 = vpack.c.b16 %v383, %v382
    %v396 = vpack.c.b16 %v385, %v384
    %v397 = vpack.c.b16 %v387, %v386
    %v398 = vpack.c.b16 %v389, %v388
    %v399 = vpack.c.b16 %v391, %v390
    %408 = vmatprep.subr.bf16.mxu0 0
    %409 = vmatpush1.bf16.msra.mxu0 %v392
    %410 = vmatprep.subr.bf16.mxu0 0
    %411 = vmatpush1.bf16.msra.mxu0 %v393
    %412 = vmatprep.subr.bf16.mxu0 0
    %413 = vmatpush1.bf16.msra.mxu0 %v394
    %414 = vmatprep.subr.bf16.mxu0 0
    %415 = vmatpush1.bf16.msra.mxu0 %v395
    %416 = vmatprep.subr.bf16.mxu0 0
    %417 = vmatpush1.bf16.msra.mxu0 %v396
    %418 = vmatprep.subr.bf16.mxu0 0
    %419 = vmatpush1.bf16.msra.mxu0 %v397
    %420 = vmatprep.subr.bf16.mxu0 0
    %421 = vmatpush1.bf16.msra.mxu0 %v398
    %422 = vmatprep.subr.bf16.mxu0 0
    %423 = vmatpush1.bf16.msra.mxu0 %v399
    %424 = vmatprep.subr.bf16.mxu0 0
    %425 = vmatpush1.bf16.msra.mxu0 0
    %426 = vmatprep.subr.bf16.mxu0 0
    %427 = vmatpush1.bf16.msra.mxu0 0
    %428 = vmatprep.subr.bf16.mxu0 0
    %429 = vmatpush1.bf16.msra.mxu0 0
    %430 = vmatprep.subr.bf16.mxu0 0
    %431 = vmatpush1.bf16.msra.mxu0 0
    %432 = vmatprep.subr.bf16.mxu0 0
    %433 = vmatpush1.bf16.msra.mxu0 0
    %434 = vmatprep.subr.bf16.mxu0 0
    %435 = vmatpush1.bf16.msra.mxu0 0
    %436 = vmatprep.subr.bf16.mxu0 0
    %437 = vmatpush1.bf16.msra.mxu0 0
    %438 = vmatprep.subr.bf16.mxu0 0
    %439 = vmatpush1.bf16.msra.mxu0 0
    %440 = vmatprep.mubr.bf16.mxu0 0
    %441 = vmatmul.mubr.bf16.gmra.mrb[0].mxu0 %v344
    %v442 = vpop.f32.mrb[0].mxu0
    %v443 = vadd.f32 %v250, %v442
    %v444 = vpop.f32.mrb[0].mxu0
    %v445 = vpop.f32.mrb[0].mxu0
    %v446 = vadd.f32 %v253, %v445
    %v447 = vpop.f32.mrb[0].mxu0
    %448 = vmatprep.mubr.bf16.mxu0 0
    %449 = vmatmul.mubr.bf16.gmra.mrb[0].mxu0 %v345
    %v450 = vpop.f32.mrb[0].mxu0
    %v451 = vadd.f32 %v258, %v450
    %v452 = vpop.f32.mrb[0].mxu0
    %v453 = vpop.f32.mrb[0].mxu0
    %v454 = vadd.f32 %v261, %v453
    %v455 = vpop.f32.mrb[0].mxu0
    %456 = vmatprep.mubr.bf16.mxu0 0
    %457 = vmatmul.mubr.bf16.gmra.mrb[0].mxu0 %v346
    %v458 = vpop.f32.mrb[0].mxu0
    %v459 = vadd.f32 %v266, %v458
    %v460 = vpop.f32.mrb[0].mxu0
    %v461 = vpop.f32.mrb[0].mxu0
    %v462 = vadd.f32 %v269, %v461
    %v463 = vpop.f32.mrb[0].mxu0
    %464 = vmatprep.mubr.bf16.mxu0 0
    %465 = vmatmul.mubr.bf16.gmra.mrb[0].mxu0 %v347
    %v466 = vpop.f32.mrb[0].mxu0
    %v467 = vadd.f32 %v274, %v466
    %v468 = vpop.f32.mrb[0].mxu0
    %v469 = vpop.f32.mrb[0].mxu0
    %v470 = vadd.f32 %v277, %v469
    %v471 = vpop.f32.mrb[0].mxu0
    %472 = vmatprep.mubr.bf16.mxu0 0
    %473 = vmatmul.mubr.bf16.gmra.mrb[0].mxu0 %v348
    %v474 = vpop.f32.mrb[0].mxu0
    %v475 = vadd.f32 %v282, %v474
    %v476 = vpop.f32.mrb[0].mxu0
    %v477 = vpop.f32.mrb[0].mxu0
    %v478 = vadd.f32 %v285, %v477
    %v479 = vpop.f32.mrb[0].mxu0
    %480 = vmatprep.mubr.bf16.mxu0 0
    %481 = vmatmul.mubr.bf16.gmra.mrb[0].mxu0 %v349
    %v482 = vpop.f32.mrb[0].mxu0
    %v483 = vadd.f32 %v290, %v482
    %v484 = vpop.f32.mrb[0].mxu0
    %v485 = vpop.f32.mrb[0].mxu0
    %v486 = vadd.f32 %v293, %v485
    %v487 = vpop.f32.mrb[0].mxu0
    %488 = vmatprep.mubr.bf16.mxu0 0
    %489 = vmatmul.mubr.bf16.gmra.mrb[0].mxu0 %v350
    %v490 = vpop.f32.mrb[0].mxu0
    %v491 = vadd.f32 %v298, %v490
    %v492 = vpop.f32.mrb[0].mxu0
    %v493 = vpop.f32.mrb[0].mxu0
    %v494 = vadd.f32 %v301, %v493
    %v495 = vpop.f32.mrb[0].mxu0
    %496 = vmatprep.mubr.bf16.mxu0 0
    %497 = vmatmul.mubr.bf16.gmra.mrb[0].mxu0 %v351
    %v498 = vpop.f32.mrb[0].mxu0
    %v499 = vadd.f32 %v306, %v498
    %v500 = vpop.f32.mrb[0].mxu0
    %v501 = vpop.f32.mrb[0].mxu0
    %v502 = vadd.f32 %v309, %v501
    %v503 = vpop.f32.mrb[0].mxu0
    %504 = vdwg.mxu0
    %v505 = vld [vmem:[%s0] sm:$0xff]
    %v506 = vld [vmem:[%s0 + $0x8] sm:$0xff]
    %v507 = vld [vmem:[%s0 + $0x10] sm:$0xff]
    %v508 = vld [vmem:[%s0 + $0x18] sm:$0xff]
    %v509 = vld [vmem:[%s0 + $0x20] sm:$0xff]
    %v510 = vld [vmem:[%s0 + $0x28] sm:$0xff]
    %v511 = vld [vmem:[%s0 + $0x30] sm:$0xff]
    %v512 = vld [vmem:[%s0 + $0x38] sm:$0xff]
    %v513 = vld [vmem:[%s0 + $0x40] sm:$0xff]
    %v514 = vld [vmem:[%s0 + $0x48] sm:$0xff]
    %v515 = vld [vmem:[%s0 + $0x50] sm:$0xff]
    %v516 = vld [vmem:[%s0 + $0x58] sm:$0xff]
    %v517 = vld [vmem:[%s0 + $0x60] sm:$0xff]
    %v518 = vld [vmem:[%s0 + $0x68] sm:$0xff]
    %v519 = vld [vmem:[%s0 + $0x70] sm:$0xff]
    %v520 = vld [vmem:[%s0 + $0x78] sm:$0xff]
    %v521 = vpack.c.bf16 %v506, %v505
    %v522 = vpack.c.bf16 %v508, %v507
    %v523 = vpack.c.bf16 %v510, %v509
    %v524 = vpack.c.bf16 %v512, %v511
    %v525 = vpack.c.bf16 %v514, %v513
    %v526 = vpack.c.bf16 %v516, %v515
    %v527 = vpack.c.bf16 %v518, %v517
    %v528 = vpack.c.bf16 %v520, %v519
    %v529 = vld [vmem:[%s5] sm:$0xf]
    %v530 = vld [vmem:[%s5 + $0x4] sm:$0xf]
    %v533 = vunpack.c.l.b16 %v529
    %v534 = vunpack.c.l.b16 %v530
    %v535 = vpack.c.b16 %v534, %v533
    %vm537 = vcmask 130048
    %v539 = vsel %vm537, %v521, 0
    %v542 = vsel %vm537, %v522, 0
    %v545 = vsel %vm537, %v523, 0
    %v548 = vsel %vm537, %v524, 0
    %v551 = vsel %vm537, %v525, 0
    %v554 = vsel %vm537, %v526, 0
    %v557 = vsel %vm537, %v527, 0
    %v560 = vsel %vm537, %v528, 0
    %562 = vmatprep.subr.bf16.mxu0 0
    %563 = vmatpush1.bf16.msra.mxu0 %v535
    %564 = vmatprep.subr.bf16.mxu0 0
    %565 = vmatpush1.bf16.msra.mxu0 0
    %566 = vmatprep.subr.bf16.mxu0 0
    %567 = vmatpush1.bf16.msra.mxu0 0
    %568 = vmatprep.subr.bf16.mxu0 0
    %569 = vmatpush1.bf16.msra.mxu0 0
    %570 = vmatprep.subr.bf16.mxu0 0
    %571 = vmatpush1.bf16.msra.mxu0 0
    %572 = vmatprep.subr.bf16.mxu0 0
    %573 = vmatpush1.bf16.msra.mxu0 0
    %574 = vmatprep.subr.bf16.mxu0 0
    %575 = vmatpush1.bf16.msra.mxu0 0
    %576 = vmatprep.subr.bf16.mxu0 0
    %577 = vmatpush1.bf16.msra.mxu0 0
    %578 = vmatprep.subr.bf16.mxu0 0
    %579 = vmatpush1.bf16.msra.mxu0 0
    %580 = vmatprep.subr.bf16.mxu0 0
    %581 = vmatpush1.bf16.msra.mxu0 0
    %582 = vmatprep.subr.bf16.mxu0 0
    %583 = vmatpush1.bf16.msra.mxu0 0
    %584 = vmatprep.subr.bf16.mxu0 0
    %585 = vmatpush1.bf16.msra.mxu0 0
    %586 = vmatprep.subr.bf16.mxu0 0
    %587 = vmatpush1.bf16.msra.mxu0 0
    %588 = vmatprep.subr.bf16.mxu0 0
    %589 = vmatpush1.bf16.msra.mxu0 0
    %590 = vmatprep.subr.bf16.mxu0 0
    %591 = vmatpush1.bf16.msra.mxu0 0
    %592 = vmatprep.subr.bf16.mxu0 0
    %593 = vmatpush1.bf16.msra.mxu0 0
    %594 = vmatprep.mubr.bf16.mxu0 0
    %595 = vmatmul.mubr.bf16.gmra.mrb[0].mxu0 %v539
    %v596 = vpop.f32.mrb[0].mxu0
    %v597 = vadd.f32 0.0, %v596
    %v598 = vpop.f32.mrb[0].mxu0
    %v599 = vpop.f32.mrb[0].mxu0
    %v600 = vadd.f32 0.0, %v599
    %v601 = vpop.f32.mrb[0].mxu0
    %602 = vmatprep.mubr.bf16.mxu0 0
    %603 = vmatmul.mubr.bf16.gmra.mrb[0].mxu0 %v542
    %v604 = vpop.f32.mrb[0].mxu0
    %v605 = vadd.f32 0.0, %v604
    %v606 = vpop.f32.mrb[0].mxu0
    %v607 = vpop.f32.mrb[0].mxu0
    %v608 = vadd.f32 0.0, %v607
    %v609 = vpop.f32.mrb[0].mxu0
    %610 = vmatprep.mubr.bf16.mxu0 0
    %611 = vmatmul.mubr.bf16.gmra.mrb[0].mxu0 %v545
    %v612 = vpop.f32.mrb[0].mxu0
    %v613 = vadd.f32 0.0, %v612
    %v614 = vpop.f32.mrb[0].mxu0
    %v615 = vpop.f32.mrb[0].mxu0
    %v616 = vadd.f32 0.0, %v615
    %v617 = vpop.f32.mrb[0].mxu0
    %618 = vmatprep.mubr.bf16.mxu0 0
    %619 = vmatmul.mubr.bf16.gmra.mrb[0].mxu0 %v548
    %v620 = vpop.f32.mrb[0].mxu0
    %v621 = vadd.f32 0.0, %v620
    %v622 = vpop.f32.mrb[0].mxu0
    %v623 = vpop.f32.mrb[0].mxu0
    %v624 = vadd.f32 0.0, %v623
    %v625 = vpop.f32.mrb[0].mxu0
    %626 = vmatprep.mubr.bf16.mxu0 0
    %627 = vmatmul.mubr.bf16.gmra.mrb[0].mxu0 %v551
    %v628 = vpop.f32.mrb[0].mxu0
    %v629 = vadd.f32 0.0, %v628
    %v630 = vpop.f32.mrb[0].mxu0
    %v631 = vpop.f32.mrb[0].mxu0
    %v632 = vadd.f32 0.0, %v631
    %v633 = vpop.f32.mrb[0].mxu0
    %634 = vmatprep.mubr.bf16.mxu0 0
    %635 = vmatmul.mubr.bf16.gmra.mrb[0].mxu0 %v554
    %v636 = vpop.f32.mrb[0].mxu0
    %v637 = vadd.f32 0.0, %v636
    %v638 = vpop.f32.mrb[0].mxu0
    %v639 = vpop.f32.mrb[0].mxu0
    %v640 = vadd.f32 0.0, %v639
    %v641 = vpop.f32.mrb[0].mxu0
    %642 = vmatprep.mubr.bf16.mxu0 0
    %643 = vmatmul.mubr.bf16.gmra.mrb[0].mxu0 %v557
    %v644 = vpop.f32.mrb[0].mxu0
    %v645 = vadd.f32 0.0, %v644
    %v646 = vpop.f32.mrb[0].mxu0
    %v647 = vpop.f32.mrb[0].mxu0
    %v648 = vadd.f32 0.0, %v647
    %v649 = vpop.f32.mrb[0].mxu0
    %650 = vmatprep.mubr.bf16.mxu0 0
    %651 = vmatmul.mubr.bf16.gmra.mrb[0].mxu0 %v560
    %v652 = vpop.f32.mrb[0].mxu0
    %v653 = vadd.f32 0.0, %v652
    %v654 = vpop.f32.mrb[0].mxu0
    %v655 = vpop.f32.mrb[0].mxu0
    %v656 = vadd.f32 0.0, %v655
    %v657 = vpop.f32.mrb[0].mxu0
    %658 = vdwg.mxu0
    %v659 = vadd.f32 %v443, %v597
    %v660 = vadd.f32 %v446, %v600
    %v661 = vadd.f32 %v451, %v605
    %v662 = vadd.f32 %v454, %v608
    %v663 = vadd.f32 %v459, %v613
    %v664 = vadd.f32 %v462, %v616
    %v665 = vadd.f32 %v467, %v621
    %v666 = vadd.f32 %v470, %v624
    %v667 = vadd.f32 %v475, %v629
    %v668 = vadd.f32 %v478, %v632
    %v669 = vadd.f32 %v483, %v637
    %v670 = vadd.f32 %v486, %v640
    %v671 = vadd.f32 %v491, %v645
    %v672 = vadd.f32 %v494, %v648
    %v673 = vadd.f32 %v499, %v653
    %v674 = vadd.f32 %v502, %v656
    %v675 = vld [vmem:[%s2] sm:$0xff]
    %v676 = vld [vmem:[%s2 + $0x8] sm:$0xff]
    %v677 = vld [vmem:[%s2 + $0x10] sm:$0xff]
    %v678 = vld [vmem:[%s2 + $0x18] sm:$0xff]
    %v679 = vld [vmem:[%s2 + $0x20] sm:$0xff]
    %v680 = vld [vmem:[%s2 + $0x28] sm:$0xff]
    %v681 = vld [vmem:[%s2 + $0x30] sm:$0xff]
    %v682 = vld [vmem:[%s2 + $0x38] sm:$0xff]
    %v683 = vld [vmem:[%s2 + $0x40] sm:$0xff]
    %v684 = vld [vmem:[%s2 + $0x48] sm:$0xff]
    %v685 = vld [vmem:[%s2 + $0x50] sm:$0xff]
    %v686 = vld [vmem:[%s2 + $0x58] sm:$0xff]
    %v687 = vld [vmem:[%s2 + $0x60] sm:$0xff]
    %v688 = vld [vmem:[%s2 + $0x68] sm:$0xff]
    %v689 = vld [vmem:[%s2 + $0x70] sm:$0xff]
    %v690 = vld [vmem:[%s2 + $0x78] sm:$0xff]
    %v691 = vpack.c.bf16 %v676, %v675
    %v692 = vpack.c.bf16 %v678, %v677
    %v693 = vpack.c.bf16 %v680, %v679
    %v694 = vpack.c.bf16 %v682, %v681
    %v695 = vpack.c.bf16 %v684, %v683
    %v696 = vpack.c.bf16 %v686, %v685
    %v697 = vpack.c.bf16 %v688, %v687
    %v698 = vpack.c.bf16 %v690, %v689
    %v699 = vld [vmem:[%s7] sm:$0xf]
    %v700 = vld [vmem:[%s7 + $0x4] sm:$0xf]
    %v703 = vunpack.c.l.b16 %v699
    %v704 = vunpack.c.l.b16 %v700
    %v705 = vpack.c.b16 %v704, %v703
    %v708 = vsel %vm537, %v691, 0
    %v711 = vsel %vm537, %v692, 0
    %v714 = vsel %vm537, %v693, 0
    %v717 = vsel %vm537, %v694, 0
    %v720 = vsel %vm537, %v695, 0
    %v723 = vsel %vm537, %v696, 0
    %v726 = vsel %vm537, %v697, 0
    %v729 = vsel %vm537, %v698, 0
    %731 = vmatprep.subr.bf16.mxu0 0
    %732 = vmatpush1.bf16.msra.mxu0 %v705
    %733 = vmatprep.subr.bf16.mxu0 0
    %734 = vmatpush1.bf16.msra.mxu0 0
    %735 = vmatprep.subr.bf16.mxu0 0
    %736 = vmatpush1.bf16.msra.mxu0 0
    %737 = vmatprep.subr.bf16.mxu0 0
    %738 = vmatpush1.bf16.msra.mxu0 0
    %739 = vmatprep.subr.bf16.mxu0 0
    %740 = vmatpush1.bf16.msra.mxu0 0
    %741 = vmatprep.subr.bf16.mxu0 0
    %742 = vmatpush1.bf16.msra.mxu0 0
    %743 = vmatprep.subr.bf16.mxu0 0
    %744 = vmatpush1.bf16.msra.mxu0 0
    %745 = vmatprep.subr.bf16.mxu0 0
    %746 = vmatpush1.bf16.msra.mxu0 0
    %747 = vmatprep.subr.bf16.mxu0 0
    %748 = vmatpush1.bf16.msra.mxu0 0
    %749 = vmatprep.subr.bf16.mxu0 0
    %750 = vmatpush1.bf16.msra.mxu0 0
    %751 = vmatprep.subr.bf16.mxu0 0
    %752 = vmatpush1.bf16.msra.mxu0 0
    %753 = vmatprep.subr.bf16.mxu0 0
    %754 = vmatpush1.bf16.msra.mxu0 0
    %755 = vmatprep.subr.bf16.mxu0 0
    %756 = vmatpush1.bf16.msra.mxu0 0
    %757 = vmatprep.subr.bf16.mxu0 0
    %758 = vmatpush1.bf16.msra.mxu0 0
    %759 = vmatprep.subr.bf16.mxu0 0
    %760 = vmatpush1.bf16.msra.mxu0 0
    %761 = vmatprep.subr.bf16.mxu0 0
    %762 = vmatpush1.bf16.msra.mxu0 0
    %763 = vmatprep.mubr.bf16.mxu0 0
    %764 = vmatmul.mubr.bf16.gmra.mrb[0].mxu0 %v708
    %v765 = vpop.f32.mrb[0].mxu0
    %v766 = vadd.f32 0.0, %v765
    %v767 = vpop.f32.mrb[0].mxu0
    %v768 = vpop.f32.mrb[0].mxu0
    %v769 = vadd.f32 0.0, %v768
    %v770 = vpop.f32.mrb[0].mxu0
    %771 = vmatprep.mubr.bf16.mxu0 0
    %772 = vmatmul.mubr.bf16.gmra.mrb[0].mxu0 %v711
    %v773 = vpop.f32.mrb[0].mxu0
    %v774 = vadd.f32 0.0, %v773
    %v775 = vpop.f32.mrb[0].mxu0
    %v776 = vpop.f32.mrb[0].mxu0
    %v777 = vadd.f32 0.0, %v776
    %v778 = vpop.f32.mrb[0].mxu0
    %779 = vmatprep.mubr.bf16.mxu0 0
    %780 = vmatmul.mubr.bf16.gmra.mrb[0].mxu0 %v714
    %v781 = vpop.f32.mrb[0].mxu0
    %v782 = vadd.f32 0.0, %v781
    %v783 = vpop.f32.mrb[0].mxu0
    %v784 = vpop.f32.mrb[0].mxu0
    %v785 = vadd.f32 0.0, %v784
    %v786 = vpop.f32.mrb[0].mxu0
    %787 = vmatprep.mubr.bf16.mxu0 0
    %788 = vmatmul.mubr.bf16.gmra.mrb[0].mxu0 %v717
    %v789 = vpop.f32.mrb[0].mxu0
    %v790 = vadd.f32 0.0, %v789
    %v791 = vpop.f32.mrb[0].mxu0
    %v792 = vpop.f32.mrb[0].mxu0
    %v793 = vadd.f32 0.0, %v792
    %v794 = vpop.f32.mrb[0].mxu0
    %795 = vmatprep.mubr.bf16.mxu0 0
    %796 = vmatmul.mubr.bf16.gmra.mrb[0].mxu0 %v720
    %v797 = vpop.f32.mrb[0].mxu0
    %v798 = vadd.f32 0.0, %v797
    %v799 = vpop.f32.mrb[0].mxu0
    %v800 = vpop.f32.mrb[0].mxu0
    %v801 = vadd.f32 0.0, %v800
    %v802 = vpop.f32.mrb[0].mxu0
    %803 = vmatprep.mubr.bf16.mxu0 0
    %804 = vmatmul.mubr.bf16.gmra.mrb[0].mxu0 %v723
    %v805 = vpop.f32.mrb[0].mxu0
    %v806 = vadd.f32 0.0, %v805
    %v807 = vpop.f32.mrb[0].mxu0
    %v808 = vpop.f32.mrb[0].mxu0
    %v809 = vadd.f32 0.0, %v808
    %v810 = vpop.f32.mrb[0].mxu0
    %811 = vmatprep.mubr.bf16.mxu0 0
    %812 = vmatmul.mubr.bf16.gmra.mrb[0].mxu0 %v726
    %v813 = vpop.f32.mrb[0].mxu0
    %v814 = vadd.f32 0.0, %v813
    %v815 = vpop.f32.mrb[0].mxu0
    %v816 = vpop.f32.mrb[0].mxu0
    %v817 = vadd.f32 0.0, %v816
    %v818 = vpop.f32.mrb[0].mxu0
    %819 = vmatprep.mubr.bf16.mxu0 0
    %820 = vmatmul.mubr.bf16.gmra.mrb[0].mxu0 %v729
    %v821 = vpop.f32.mrb[0].mxu0
    %v822 = vadd.f32 0.0, %v821
    %v823 = vpop.f32.mrb[0].mxu0
    %v824 = vpop.f32.mrb[0].mxu0
    %v825 = vadd.f32 0.0, %v824
    %v826 = vpop.f32.mrb[0].mxu0
    %827 = vdwg.mxu0
    %v828 = vadd.f32 %v659, %v766
    %v829 = vadd.f32 %v660, %v769
    %v830 = vadd.f32 %v661, %v774
    %v831 = vadd.f32 %v662, %v777
    %v832 = vadd.f32 %v663, %v782
    %v833 = vadd.f32 %v664, %v785
    %v834 = vadd.f32 %v665, %v790
    %v835 = vadd.f32 %v666, %v793
    %v836 = vadd.f32 %v667, %v798
    %v837 = vadd.f32 %v668, %v801
    %v838 = vadd.f32 %v669, %v806
    %v839 = vadd.f32 %v670, %v809
    %v840 = vadd.f32 %v671, %v814
    %v841 = vadd.f32 %v672, %v817
    %v842 = vadd.f32 %v673, %v822
    %v843 = vadd.f32 %v674, %v825
    %v844 = vld [vmem:[%s4] sm:$0xff]
    %v845 = vld [vmem:[%s4 + $0x8] sm:$0xff]
    %v846 = vld [vmem:[%s4 + $0x10] sm:$0xff]
    %v847 = vld [vmem:[%s4 + $0x18] sm:$0xff]
    %v848 = vld [vmem:[%s4 + $0x20] sm:$0xff]
    %v849 = vld [vmem:[%s4 + $0x28] sm:$0xff]
    %v850 = vld [vmem:[%s4 + $0x30] sm:$0xff]
    %v851 = vld [vmem:[%s4 + $0x38] sm:$0xff]
    %v852 = vld [vmem:[%s4 + $0x40] sm:$0xff]
    %v853 = vld [vmem:[%s4 + $0x48] sm:$0xff]
    %v854 = vld [vmem:[%s4 + $0x50] sm:$0xff]
    %v855 = vld [vmem:[%s4 + $0x58] sm:$0xff]
    %v856 = vld [vmem:[%s4 + $0x60] sm:$0xff]
    %v857 = vld [vmem:[%s4 + $0x68] sm:$0xff]
    %v858 = vld [vmem:[%s4 + $0x70] sm:$0xff]
    %v859 = vld [vmem:[%s4 + $0x78] sm:$0xff]
    %v860 = vpack.c.bf16 %v845, %v844
    %v861 = vpack.c.bf16 %v847, %v846
    %v862 = vpack.c.bf16 %v849, %v848
    %v863 = vpack.c.bf16 %v851, %v850
    %v864 = vpack.c.bf16 %v853, %v852
    %v865 = vpack.c.bf16 %v855, %v854
    %v866 = vpack.c.bf16 %v857, %v856
    %v867 = vpack.c.bf16 %v859, %v858
    %v868 = vld [vmem:[%s9] sm:$0xf]
    %vm869 = vcmask 64512
    %v871 = vsel %vm869, %v860, 0
    %v874 = vsel %vm869, %v861, 0
    %v877 = vsel %vm869, %v862, 0
    %v880 = vsel %vm869, %v863, 0
    %v883 = vsel %vm869, %v864, 0
    %v886 = vsel %vm869, %v865, 0
    %v889 = vsel %vm869, %v866, 0
    %v892 = vsel %vm869, %v867, 0
    %vm894 = vcmask 1043456
    %v896 = vsel %vm894, %v868, 0
    %898 = vmatprep.subr.bf16.mxu0 0
    %899 = vmatpush1.bf16.msra.mxu0 %v896
    %900 = vmatprep.subr.bf16.mxu0 0
    %901 = vmatpush1.bf16.msra.mxu0 0
    %902 = vmatprep.subr.bf16.mxu0 0
    %903 = vmatpush1.bf16.msra.mxu0 0
    %904 = vmatprep.subr.bf16.mxu0 0
    %905 = vmatpush1.bf16.msra.mxu0 0
    %906 = vmatprep.subr.bf16.mxu0 0
    %907 = vmatpush1.bf16.msra.mxu0 0
    %908 = vmatprep.subr.bf16.mxu0 0
    %909 = vmatpush1.bf16.msra.mxu0 0
    %910 = vmatprep.subr.bf16.mxu0 0
    %911 = vmatpush1.bf16.msra.mxu0 0
    %912 = vmatprep.subr.bf16.mxu0 0
    %913 = vmatpush1.bf16.msra.mxu0 0
    %914 = vmatprep.subr.bf16.mxu0 0
    %915 = vmatpush1.bf16.msra.mxu0 0
    %916 = vmatprep.subr.bf16.mxu0 0
    %917 = vmatpush1.bf16.msra.mxu0 0
    %918 = vmatprep.subr.bf16.mxu0 0
    %919 = vmatpush1.bf16.msra.mxu0 0
    %920 = vmatprep.subr.bf16.mxu0 0
    %921 = vmatpush1.bf16.msra.mxu0 0
    %922 = vmatprep.subr.bf16.mxu0 0
    %923 = vmatpush1.bf16.msra.mxu0 0
    %924 = vmatprep.subr.bf16.mxu0 0
    %925 = vmatpush1.bf16.msra.mxu0 0
    %926 = vmatprep.subr.bf16.mxu0 0
    %927 = vmatpush1.bf16.msra.mxu0 0
    %928 = vmatprep.subr.bf16.mxu0 0
    %929 = vmatpush1.bf16.msra.mxu0 0
    %930 = vmatprep.mubr.bf16.mxu0 0
    %931 = vmatmul.mubr.bf16.gmra.mrb[0].mxu0 %v871
    %v932 = vpop.f32.mrb[0].mxu0
    %v933 = vadd.f32 0.0, %v932
    %v934 = vpop.f32.mrb[0].mxu0
    %v935 = vpop.f32.mrb[0].mxu0
    %v936 = vadd.f32 0.0, %v935
    %v937 = vpop.f32.mrb[0].mxu0
    %938 = vmatprep.mubr.bf16.mxu0 0
    %939 = vmatmul.mubr.bf16.gmra.mrb[0].mxu0 %v874
    %v940 = vpop.f32.mrb[0].mxu0
    %v941 = vadd.f32 0.0, %v940
    %v942 = vpop.f32.mrb[0].mxu0
    %v943 = vpop.f32.mrb[0].mxu0
    %v944 = vadd.f32 0.0, %v943
    %v945 = vpop.f32.mrb[0].mxu0
    %946 = vmatprep.mubr.bf16.mxu0 0
    %947 = vmatmul.mubr.bf16.gmra.mrb[0].mxu0 %v877
    %v948 = vpop.f32.mrb[0].mxu0
    %v949 = vadd.f32 0.0, %v948
    %v950 = vpop.f32.mrb[0].mxu0
    %v951 = vpop.f32.mrb[0].mxu0
    %v952 = vadd.f32 0.0, %v951
    %v953 = vpop.f32.mrb[0].mxu0
    %954 = vmatprep.mubr.bf16.mxu0 0
    %955 = vmatmul.mubr.bf16.gmra.mrb[0].mxu0 %v880
    %v956 = vpop.f32.mrb[0].mxu0
    %v957 = vadd.f32 0.0, %v956
    %v958 = vpop.f32.mrb[0].mxu0
    %v959 = vpop.f32.mrb[0].mxu0
    %v960 = vadd.f32 0.0, %v959
    %v961 = vpop.f32.mrb[0].mxu0
    %962 = vmatprep.mubr.bf16.mxu0 0
    %963 = vmatmul.mubr.bf16.gmra.mrb[0].mxu0 %v883
    %v964 = vpop.f32.mrb[0].mxu0
    %v965 = vadd.f32 0.0, %v964
    %v966 = vpop.f32.mrb[0].mxu0
    %v967 = vpop.f32.mrb[0].mxu0
    %v968 = vadd.f32 0.0, %v967
    %v969 = vpop.f32.mrb[0].mxu0
    %970 = vmatprep.mubr.bf16.mxu0 0
    %971 = vmatmul.mubr.bf16.gmra.mrb[0].mxu0 %v886
    %v972 = vpop.f32.mrb[0].mxu0
    %v973 = vadd.f32 0.0, %v972
    %v974 = vpop.f32.mrb[0].mxu0
    %v975 = vpop.f32.mrb[0].mxu0
    %v976 = vadd.f32 0.0, %v975
    %v977 = vpop.f32.mrb[0].mxu0
    %978 = vmatprep.mubr.bf16.mxu0 0
    %979 = vmatmul.mubr.bf16.gmra.mrb[0].mxu0 %v889
    %v980 = vpop.f32.mrb[0].mxu0
    %v981 = vadd.f32 0.0, %v980
    %v982 = vpop.f32.mrb[0].mxu0
    %v983 = vpop.f32.mrb[0].mxu0
    %v984 = vadd.f32 0.0, %v983
    %v985 = vpop.f32.mrb[0].mxu0
    %986 = vmatprep.mubr.bf16.mxu0 0
    %987 = vmatmul.mubr.bf16.gmra.mrb[0].mxu0 %v892
    %v988 = vpop.f32.mrb[0].mxu0
    %v989 = vadd.f32 0.0, %v988
    %v990 = vpop.f32.mrb[0].mxu0
    %v991 = vpop.f32.mrb[0].mxu0
    %v992 = vadd.f32 0.0, %v991
    %v993 = vpop.f32.mrb[0].mxu0
    %994 = vdwg.mxu0
    %v995 = vadd.f32 %v828, %v933
    %v996 = vadd.f32 %v829, %v936
    %v997 = vadd.f32 %v830, %v941
    %v998 = vadd.f32 %v831, %v944
    %v999 = vadd.f32 %v832, %v949
    %v1000 = vadd.f32 %v833, %v952
    %v1001 = vadd.f32 %v834, %v957
    %v1002 = vadd.f32 %v835, %v960
    %v1003 = vadd.f32 %v836, %v965
    %v1004 = vadd.f32 %v837, %v968
    %v1005 = vadd.f32 %v838, %v973
    %v1006 = vadd.f32 %v839, %v976
    %v1007 = vadd.f32 %v840, %v981
    %v1008 = vadd.f32 %v841, %v984
    %v1009 = vadd.f32 %v842, %v989
    %v1010 = vadd.f32 %v843, %v992
    %v1011 = vld [vmem:[%s10] sm:$0x1]
    %v1013 = vlaneseq
    %v1014 = vshrl.u32 %v1013, 7
    %v1015 = vsub.s32 0, %v1014
    %v1016 = vrot.slane %v1011, %v1015
    %v1018 = vadd.f32 %v995, %v1016
    %v1019 = vadd.f32 %v996, %v1016
    %v1020 = vadd.f32 %v997, %v1016
    %v1021 = vadd.f32 %v998, %v1016
    %v1022 = vadd.f32 %v999, %v1016
    %v1023 = vadd.f32 %v1000, %v1016
    %v1024 = vadd.f32 %v1001, %v1016
    %v1025 = vadd.f32 %v1002, %v1016
    %v1026 = vadd.f32 %v1003, %v1016
    %v1027 = vadd.f32 %v1004, %v1016
    %v1028 = vadd.f32 %v1005, %v1016
    %v1029 = vadd.f32 %v1006, %v1016
    %v1030 = vadd.f32 %v1007, %v1016
    %v1031 = vadd.f32 %v1008, %v1016
    %v1032 = vadd.f32 %v1009, %v1016
    %v1033 = vadd.f32 %v1010, %v1016
    %v1034 = vmax.f32 %v1018, 0.0
    %v1035 = vmax.f32 %v1019, 0.0
    %v1036 = vmax.f32 %v1020, 0.0
    %v1037 = vmax.f32 %v1021, 0.0
    %v1038 = vmax.f32 %v1022, 0.0
    %v1039 = vmax.f32 %v1023, 0.0
    %v1040 = vmax.f32 %v1024, 0.0
    %v1041 = vmax.f32 %v1025, 0.0
    %v1042 = vmax.f32 %v1026, 0.0
    %v1043 = vmax.f32 %v1027, 0.0
    %v1044 = vmax.f32 %v1028, 0.0
    %v1045 = vmax.f32 %v1029, 0.0
    %v1046 = vmax.f32 %v1030, 0.0
    %v1047 = vmax.f32 %v1031, 0.0
    %v1048 = vmax.f32 %v1032, 0.0
    %v1049 = vmax.f32 %v1033, 0.0
    %v1050 = vpack.c.bf16 %v1035, %v1034
    %v1051 = vpack.c.bf16 %v1037, %v1036
    %v1052 = vpack.c.bf16 %v1039, %v1038
    %v1053 = vpack.c.bf16 %v1041, %v1040
    %v1054 = vpack.c.bf16 %v1043, %v1042
    %v1055 = vpack.c.bf16 %v1045, %v1044
    %v1056 = vpack.c.bf16 %v1047, %v1046
    %v1057 = vpack.c.bf16 %v1049, %v1048
    %v1058 = vld [vmem:[%s11] sm:$0xf]
    %v1059 = vld [vmem:[%s11 + $0x4] sm:$0xf]
    %v1060 = vld [vmem:[%s11 + $0x8] sm:$0xf]
    %v1061 = vld [vmem:[%s11 + $0xc] sm:$0xf]
    %v1062 = vld [vmem:[%s11 + $0x10] sm:$0xf]
    %v1063 = vld [vmem:[%s11 + $0x14] sm:$0xf]
    %v1064 = vld [vmem:[%s11 + $0x18] sm:$0xf]
    %v1065 = vld [vmem:[%s11 + $0x1c] sm:$0xf]
    %v1066 = vld [vmem:[%s12] sm:$0x1]
    %v1068 = vlaneseq
    %v1069 = vshrl.u32 %v1068, 7
    %v1070 = vsub.s32 0, %v1069
    %v1071 = vrot.slane %v1066, %v1070
    %v1081 = vunpack.c.l.b16 %v1058
    %v1082 = vunpack.c.l.b16 %v1059
    %v1083 = vunpack.c.l.b16 %v1060
    %v1084 = vunpack.c.l.b16 %v1061
    %v1085 = vunpack.c.l.b16 %v1062
    %v1086 = vunpack.c.l.b16 %v1063
    %v1087 = vunpack.c.l.b16 %v1064
    %v1088 = vunpack.c.l.b16 %v1065
    %v1089 = vpack.c.b16 %v1082, %v1081
    %v1090 = vpack.c.b16 %v1084, %v1083
    %v1091 = vpack.c.b16 %v1086, %v1085
    %v1092 = vpack.c.b16 %v1088, %v1087
    %vm1097 = vcmask 523264
    %v1099 = vsel %vm1097, %v1050, 0
    %v1102 = vsel %vm1097, %v1051, 0
    %v1105 = vsel %vm1097, %v1052, 0
    %v1108 = vsel %vm1097, %v1053, 0
    %v1111 = vsel %vm1097, %v1054, 0
    %v1114 = vsel %vm1097, %v1055, 0
    %v1117 = vsel %vm1097, %v1056, 0
    %v1120 = vsel %vm1097, %v1057, 0
    %1122 = vmatprep.subr.bf16.mxu0 0
    %1123 = vmatpush1.bf16.msra.mxu0 %v1089
    %1124 = vmatprep.subr.bf16.mxu0 0
    %1125 = vmatpush1.bf16.msra.mxu0 %v1090
    %1126 = vmatprep.subr.bf16.mxu0 0
    %1127 = vmatpush1.bf16.msra.mxu0 %v1091
    %1128 = vmatprep.subr.bf16.mxu0 0
    %1129 = vmatpush1.bf16.msra.mxu0 %v1092
    %1130 = vmatprep.subr.bf16.mxu0 0
    %1131 = vmatpush1.bf16.msra.mxu0 0
    %1132 = vmatprep.subr.bf16.mxu0 0
    %1133 = vmatpush1.bf16.msra.mxu0 0
    %1134 = vmatprep.subr.bf16.mxu0 0
    %1135 = vmatpush1.bf16.msra.mxu0 0
    %1136 = vmatprep.subr.bf16.mxu0 0
    %1137 = vmatpush1.bf16.msra.mxu0 0
    %1138 = vmatprep.subr.bf16.mxu0 0
    %1139 = vmatpush1.bf16.msra.mxu0 0
    %1140 = vmatprep.subr.bf16.mxu0 0
    %1141 = vmatpush1.bf16.msra.mxu0 0
    %1142 = vmatprep.subr.bf16.mxu0 0
    %1143 = vmatpush1.bf16.msra.mxu0 0
    %1144 = vmatprep.subr.bf16.mxu0 0
    %1145 = vmatpush1.bf16.msra.mxu0 0
    %1146 = vmatprep.subr.bf16.mxu0 0
    %1147 = vmatpush1.bf16.msra.mxu0 0
    %1148 = vmatprep.subr.bf16.mxu0 0
    %1149 = vmatpush1.bf16.msra.mxu0 0
    %1150 = vmatprep.subr.bf16.mxu0 0
    %1151 = vmatpush1.bf16.msra.mxu0 0
    %1152 = vmatprep.subr.bf16.mxu0 0
    %1153 = vmatpush1.bf16.msra.mxu0 0
    %1154 = vmatprep.mubr.bf16.mxu0 0
    %1155 = vmatmul.mubr.bf16.gmra.mrb[0].mxu0 %v1099
    %v1156 = vpop.f32.mrb[0].mxu0
    %v1157 = vadd.f32 %v1071, %v1156
    %v1158 = vpop.f32.mrb[0].mxu0
    %v1159 = vpop.f32.mrb[0].mxu0
    %v1160 = vadd.f32 %v1071, %v1159
    %v1161 = vpop.f32.mrb[0].mxu0
    %1162 = vmatprep.mubr.bf16.mxu0 0
    %1163 = vmatmul.mubr.bf16.gmra.mrb[0].mxu0 %v1102
    %v1164 = vpop.f32.mrb[0].mxu0
    %v1165 = vadd.f32 %v1071, %v1164
    %v1166 = vpop.f32.mrb[0].mxu0
    %v1167 = vpop.f32.mrb[0].mxu0
    %v1168 = vadd.f32 %v1071, %v1167
    %v1169 = vpop.f32.mrb[0].mxu0
    %1170 = vmatprep.mubr.bf16.mxu0 0
    %1171 = vmatmul.mubr.bf16.gmra.mrb[0].mxu0 %v1105
    %v1172 = vpop.f32.mrb[0].mxu0
    %v1173 = vadd.f32 %v1071, %v1172
    %v1174 = vpop.f32.mrb[0].mxu0
    %v1175 = vpop.f32.mrb[0].mxu0
    %v1176 = vadd.f32 %v1071, %v1175
    %v1177 = vpop.f32.mrb[0].mxu0
    %1178 = vmatprep.mubr.bf16.mxu0 0
    %1179 = vmatmul.mubr.bf16.gmra.mrb[0].mxu0 %v1108
    %v1180 = vpop.f32.mrb[0].mxu0
    %v1181 = vadd.f32 %v1071, %v1180
    %v1182 = vpop.f32.mrb[0].mxu0
    %v1183 = vpop.f32.mrb[0].mxu0
    %v1184 = vadd.f32 %v1071, %v1183
    %v1185 = vpop.f32.mrb[0].mxu0
    %1186 = vmatprep.mubr.bf16.mxu0 0
    %1187 = vmatmul.mubr.bf16.gmra.mrb[0].mxu0 %v1111
    %v1188 = vpop.f32.mrb[0].mxu0
    %v1189 = vadd.f32 %v1071, %v1188
    %v1190 = vpop.f32.mrb[0].mxu0
    %v1191 = vpop.f32.mrb[0].mxu0
    %v1192 = vadd.f32 %v1071, %v1191
    %v1193 = vpop.f32.mrb[0].mxu0
    %1194 = vmatprep.mubr.bf16.mxu0 0
    %1195 = vmatmul.mubr.bf16.gmra.mrb[0].mxu0 %v1114
    %v1196 = vpop.f32.mrb[0].mxu0
    %v1197 = vadd.f32 %v1071, %v1196
    %v1198 = vpop.f32.mrb[0].mxu0
    %v1199 = vpop.f32.mrb[0].mxu0
    %v1200 = vadd.f32 %v1071, %v1199
    %v1201 = vpop.f32.mrb[0].mxu0
    %1202 = vmatprep.mubr.bf16.mxu0 0
    %1203 = vmatmul.mubr.bf16.gmra.mrb[0].mxu0 %v1117
    %v1204 = vpop.f32.mrb[0].mxu0
    %v1205 = vadd.f32 %v1071, %v1204
    %v1206 = vpop.f32.mrb[0].mxu0
    %v1207 = vpop.f32.mrb[0].mxu0
    %v1208 = vadd.f32 %v1071, %v1207
    %v1209 = vpop.f32.mrb[0].mxu0
    %1210 = vmatprep.mubr.bf16.mxu0 0
    %1211 = vmatmul.mubr.bf16.gmra.mrb[0].mxu0 %v1120
    %v1212 = vpop.f32.mrb[0].mxu0
    %v1213 = vadd.f32 %v1071, %v1212
    %v1214 = vpop.f32.mrb[0].mxu0
    %v1215 = vpop.f32.mrb[0].mxu0
    %v1216 = vadd.f32 %v1071, %v1215
    %v1217 = vpop.f32.mrb[0].mxu0
    %1218 = vdwg.mxu0
    %v1219 = vmax.f32 %v1157, 0.0
    %v1220 = vmax.f32 %v1160, 0.0
    %v1221 = vmax.f32 %v1165, 0.0
    %v1222 = vmax.f32 %v1168, 0.0
    %v1223 = vmax.f32 %v1173, 0.0
    %v1224 = vmax.f32 %v1176, 0.0
    %v1225 = vmax.f32 %v1181, 0.0
    %v1226 = vmax.f32 %v1184, 0.0
    %v1227 = vmax.f32 %v1189, 0.0
    %v1228 = vmax.f32 %v1192, 0.0
    %v1229 = vmax.f32 %v1197, 0.0
    %v1230 = vmax.f32 %v1200, 0.0
    %v1231 = vmax.f32 %v1205, 0.0
    %v1232 = vmax.f32 %v1208, 0.0
    %v1233 = vmax.f32 %v1213, 0.0
    %v1234 = vmax.f32 %v1216, 0.0
    %v1235 = vpack.c.bf16 %v1220, %v1219
    %v1236 = vpack.c.bf16 %v1222, %v1221
    %v1237 = vpack.c.bf16 %v1224, %v1223
    %v1238 = vpack.c.bf16 %v1226, %v1225
    %v1239 = vpack.c.bf16 %v1228, %v1227
    %v1240 = vpack.c.bf16 %v1230, %v1229
    %v1241 = vpack.c.bf16 %v1232, %v1231
    %v1242 = vpack.c.bf16 %v1234, %v1233
    %v1243 = vld [vmem:[%s13] sm:$0xf]
    %v1244 = vld [vmem:[%s13 + $0x4] sm:$0xf]
    %v1245 = vld [vmem:[%s13 + $0x8] sm:$0xf]
    %v1246 = vld [vmem:[%s13 + $0xc] sm:$0xf]
    %v1247 = vld [vmem:[%s14] sm:$0x1]
    %v1249 = vlaneseq
    %v1250 = vshrl.u32 %v1249, 7
    %v1251 = vsub.s32 0, %v1250
    %v1252 = vrot.slane %v1247, %v1251
    %v1258 = vunpack.c.l.b16 %v1243
    %v1259 = vunpack.c.l.b16 %v1244
    %v1260 = vunpack.c.l.b16 %v1245
    %v1261 = vunpack.c.l.b16 %v1246
    %v1262 = vpack.c.b16 %v1259, %v1258
    %v1263 = vpack.c.b16 %v1261, %v1260
    %vm1266 = vcmask 261120
    %v1268 = vsel %vm1266, %v1235, 0
    %v1271 = vsel %vm1266, %v1236, 0
    %v1274 = vsel %vm1266, %v1237, 0
    %v1277 = vsel %vm1266, %v1238, 0
    %v1280 = vsel %vm1266, %v1239, 0
    %v1283 = vsel %vm1266, %v1240, 0
    %v1286 = vsel %vm1266, %v1241, 0
    %v1289 = vsel %vm1266, %v1242, 0
    %1291 = vmatprep.subr.bf16.mxu0 0
    %1292 = vmatpush1.bf16.msra.mxu0 %v1262
    %1293 = vmatprep.subr.bf16.mxu0 0
    %1294 = vmatpush1.bf16.msra.mxu0 %v1263
    %1295 = vmatprep.subr.bf16.mxu0 0
    %1296 = vmatpush1.bf16.msra.mxu0 0
    %1297 = vmatprep.subr.bf16.mxu0 0
    %1298 = vmatpush1.bf16.msra.mxu0 0
    %1299 = vmatprep.subr.bf16.mxu0 0
    %1300 = vmatpush1.bf16.msra.mxu0 0
    %1301 = vmatprep.subr.bf16.mxu0 0
    %1302 = vmatpush1.bf16.msra.mxu0 0
    %1303 = vmatprep.subr.bf16.mxu0 0
    %1304 = vmatpush1.bf16.msra.mxu0 0
    %1305 = vmatprep.subr.bf16.mxu0 0
    %1306 = vmatpush1.bf16.msra.mxu0 0
    %1307 = vmatprep.subr.bf16.mxu0 0
    %1308 = vmatpush1.bf16.msra.mxu0 0
    %1309 = vmatprep.subr.bf16.mxu0 0
    %1310 = vmatpush1.bf16.msra.mxu0 0
    %1311 = vmatprep.subr.bf16.mxu0 0
    %1312 = vmatpush1.bf16.msra.mxu0 0
    %1313 = vmatprep.subr.bf16.mxu0 0
    %1314 = vmatpush1.bf16.msra.mxu0 0
    %1315 = vmatprep.subr.bf16.mxu0 0
    %1316 = vmatpush1.bf16.msra.mxu0 0
    %1317 = vmatprep.subr.bf16.mxu0 0
    %1318 = vmatpush1.bf16.msra.mxu0 0
    %1319 = vmatprep.subr.bf16.mxu0 0
    %1320 = vmatpush1.bf16.msra.mxu0 0
    %1321 = vmatprep.subr.bf16.mxu0 0
    %1322 = vmatpush1.bf16.msra.mxu0 0
    %1323 = vmatprep.mubr.bf16.mxu0 0
    %1324 = vmatmul.mubr.bf16.gmra.mrb[0].mxu0 %v1268
    %v1325 = vpop.f32.mrb[0].mxu0
    %v1326 = vadd.f32 %v1252, %v1325
    %v1327 = vpop.f32.mrb[0].mxu0
    %v1328 = vpop.f32.mrb[0].mxu0
    %v1329 = vadd.f32 %v1252, %v1328
    %v1330 = vpop.f32.mrb[0].mxu0
    %1331 = vmatprep.mubr.bf16.mxu0 0
    %1332 = vmatmul.mubr.bf16.gmra.mrb[0].mxu0 %v1271
    %v1333 = vpop.f32.mrb[0].mxu0
    %v1334 = vadd.f32 %v1252, %v1333
    %v1335 = vpop.f32.mrb[0].mxu0
    %v1336 = vpop.f32.mrb[0].mxu0
    %v1337 = vadd.f32 %v1252, %v1336
    %v1338 = vpop.f32.mrb[0].mxu0
    %1339 = vmatprep.mubr.bf16.mxu0 0
    %1340 = vmatmul.mubr.bf16.gmra.mrb[0].mxu0 %v1274
    %v1341 = vpop.f32.mrb[0].mxu0
    %v1342 = vadd.f32 %v1252, %v1341
    %v1343 = vpop.f32.mrb[0].mxu0
    %v1344 = vpop.f32.mrb[0].mxu0
    %v1345 = vadd.f32 %v1252, %v1344
    %v1346 = vpop.f32.mrb[0].mxu0
    %1347 = vmatprep.mubr.bf16.mxu0 0
    %1348 = vmatmul.mubr.bf16.gmra.mrb[0].mxu0 %v1277
    %v1349 = vpop.f32.mrb[0].mxu0
    %v1350 = vadd.f32 %v1252, %v1349
    %v1351 = vpop.f32.mrb[0].mxu0
    %v1352 = vpop.f32.mrb[0].mxu0
    %v1353 = vadd.f32 %v1252, %v1352
    %v1354 = vpop.f32.mrb[0].mxu0
    %1355 = vmatprep.mubr.bf16.mxu0 0
    %1356 = vmatmul.mubr.bf16.gmra.mrb[0].mxu0 %v1280
    %v1357 = vpop.f32.mrb[0].mxu0
    %v1358 = vadd.f32 %v1252, %v1357
    %v1359 = vpop.f32.mrb[0].mxu0
    %v1360 = vpop.f32.mrb[0].mxu0
    %v1361 = vadd.f32 %v1252, %v1360
    %v1362 = vpop.f32.mrb[0].mxu0
    %1363 = vmatprep.mubr.bf16.mxu0 0
    %1364 = vmatmul.mubr.bf16.gmra.mrb[0].mxu0 %v1283
    %v1365 = vpop.f32.mrb[0].mxu0
    %v1366 = vadd.f32 %v1252, %v1365
    %v1367 = vpop.f32.mrb[0].mxu0
    %v1368 = vpop.f32.mrb[0].mxu0
    %v1369 = vadd.f32 %v1252, %v1368
    %v1370 = vpop.f32.mrb[0].mxu0
    %1371 = vmatprep.mubr.bf16.mxu0 0
    %1372 = vmatmul.mubr.bf16.gmra.mrb[0].mxu0 %v1286
    %v1373 = vpop.f32.mrb[0].mxu0
    %v1374 = vadd.f32 %v1252, %v1373
    %v1375 = vpop.f32.mrb[0].mxu0
    %v1376 = vpop.f32.mrb[0].mxu0
    %v1377 = vadd.f32 %v1252, %v1376
    %v1378 = vpop.f32.mrb[0].mxu0
    %1379 = vmatprep.mubr.bf16.mxu0 0
    %1380 = vmatmul.mubr.bf16.gmra.mrb[0].mxu0 %v1289
    %v1381 = vpop.f32.mrb[0].mxu0
    %v1382 = vadd.f32 %v1252, %v1381
    %v1383 = vpop.f32.mrb[0].mxu0
    %v1384 = vpop.f32.mrb[0].mxu0
    %v1385 = vadd.f32 %v1252, %v1384
    %v1386 = vpop.f32.mrb[0].mxu0
    %1387 = vdwg.mxu0
    %v1388 = vmax.f32 %v1326, 0.0
    %v1389 = vmax.f32 %v1329, 0.0
    %v1390 = vmax.f32 %v1334, 0.0
    %v1391 = vmax.f32 %v1337, 0.0
    %v1392 = vmax.f32 %v1342, 0.0
    %v1393 = vmax.f32 %v1345, 0.0
    %v1394 = vmax.f32 %v1350, 0.0
    %v1395 = vmax.f32 %v1353, 0.0
    %v1396 = vmax.f32 %v1358, 0.0
    %v1397 = vmax.f32 %v1361, 0.0
    %v1398 = vmax.f32 %v1366, 0.0
    %v1399 = vmax.f32 %v1369, 0.0
    %v1400 = vmax.f32 %v1374, 0.0
    %v1401 = vmax.f32 %v1377, 0.0
    %v1402 = vmax.f32 %v1382, 0.0
    %v1403 = vmax.f32 %v1385, 0.0
    %v1404 = vld [vmem:[%s15] sm:$0x1]
    %v1405 = vpack.c.bf16 %v1389, %v1388
    %v1406 = vpack.c.bf16 %v1391, %v1390
    %v1407 = vpack.c.bf16 %v1393, %v1392
    %v1408 = vpack.c.bf16 %v1395, %v1394
    %v1409 = vpack.c.bf16 %v1397, %v1396
    %v1410 = vpack.c.bf16 %v1399, %v1398
    %v1411 = vpack.c.bf16 %v1401, %v1400
    %v1412 = vpack.c.bf16 %v1403, %v1402
    %v1414 = vsel %vm537, %v1404, 0
    %v1417 = vsel %vm537, %v1405, 0
    %v1420 = vsel %vm537, %v1406, 0
    %v1423 = vsel %vm537, %v1407, 0
    %v1426 = vsel %vm537, %v1408, 0
    %v1429 = vsel %vm537, %v1409, 0
    %v1432 = vsel %vm537, %v1410, 0
    %v1435 = vsel %vm537, %v1411, 0
    %v1438 = vsel %vm537, %v1412, 0
    %1440 = vmatprep.subr.bf16.mxu0 0
    %1441 = vmatpush1.bf16.xpose.msra.mxu0 %v1417
    %1442 = vmatprep.subr.bf16.mxu0 0
    %1443 = vmatpush1.bf16.xpose.msra.mxu0 %v1420
    %1444 = vmatprep.subr.bf16.mxu0 0
    %1445 = vmatpush1.bf16.xpose.msra.mxu0 %v1423
    %1446 = vmatprep.subr.bf16.mxu0 0
    %1447 = vmatpush1.bf16.xpose.msra.mxu0 %v1426
    %1448 = vmatprep.subr.bf16.mxu0 0
    %1449 = vmatpush1.bf16.xpose.msra.mxu0 %v1429
    %1450 = vmatprep.subr.bf16.mxu0 0
    %1451 = vmatpush1.bf16.xpose.msra.mxu0 %v1432
    %1452 = vmatprep.subr.bf16.mxu0 0
    %1453 = vmatpush1.bf16.xpose.msra.mxu0 %v1435
    %1454 = vmatprep.subr.bf16.mxu0 0
    %1455 = vmatpush1.bf16.xpose.msra.mxu0 %v1438
    %1456 = vmatprep.subr.bf16.mxu0 0
    %1457 = vmatpush1.bf16.xpose.msra.mxu0 0
    %1458 = vmatprep.subr.bf16.mxu0 0
    %1459 = vmatpush1.bf16.xpose.msra.mxu0 0
    %1460 = vmatprep.subr.bf16.mxu0 0
    %1461 = vmatpush1.bf16.xpose.msra.mxu0 0
    %1462 = vmatprep.subr.bf16.mxu0 0
    %1463 = vmatpush1.bf16.xpose.msra.mxu0 0
    %1464 = vmatprep.subr.bf16.mxu0 0
    %1465 = vmatpush1.bf16.xpose.msra.mxu0 0
    %1466 = vmatprep.subr.bf16.mxu0 0
    %1467 = vmatpush1.bf16.xpose.msra.mxu0 0
    %1468 = vmatprep.subr.bf16.mxu0 0
    %1469 = vmatpush1.bf16.xpose.msra.mxu0 0
    %1470 = vmatprep.subr.bf16.mxu0 0
    %1471 = vmatpush1.bf16.xpose.msra.mxu0 0
    %1472 = vmatprep.mubr.bf16.mxu0 0
    %1473 = vmatmul.mubr.bf16.gmra.mrb[0].mxu0 %v1414
    %v1474 = vpop.f32.mrb[0].mxu0
    %v1475 = vadd.f32 0.0, %v1474
    %v1476 = vpop.f32.mrb[0].mxu0
    %v1477 = vpop.f32.mrb[0].mxu0
    %v1478 = vpop.f32.mrb[0].mxu0
    %1479 = vdwg.mxu0
    %1480 = vst [vmem:[#allocation2] sm:$0x1] %v1475
    // Predicated region
    $region66: #{tpu_custom_call.1} parent=1 // pred_check
      _
    $region67: #{tpu_custom_call.1} parent=1 // pred_check_branch
      %1482 = sbr.rel (0) target = $region69
    $region68: #{tpu_custom_call.1} parent=1 // pred_region
      %s1484 = ssub.s32 16, 16
      %1485 = vsyncadd [#allocation3], %s1484
      %s1487 = sshll.u32 [#allocation2], 4
      %s1488 = int_to_ptr.vmem [resolvable:$true] %s1487
      %1490 = dma.vmem_to_hbm [thread:$0]  %s1488, 16, %s16, [#allocation3]
    $region69: #{tpu_custom_call.1} parent=1 // pred_fallthru
      _
    // Predicated region
    $region70: #{tpu_custom_call.1} parent=1 // pred_check
      _
    $region71: #{tpu_custom_call.1} parent=1 // pred_check_branch
      %1492 = sbr.rel (0) target = $region73
    $region72: #{tpu_custom_call.1} parent=1 // pred_region
      %1493 = dma.done [#allocation3], 16
    $region73: #{tpu_custom_call.1} parent=1 // pred_fallthru
      _
    %1494 = vsyncpa [#allocation3], 1

</llo_original>
